<compile_context>
chip_gen: v7x
topology: tpu7x:2x2x1
jax: 0.10.0
libtpu: 0.0.40
codegen_flags: <defaults>
</compile_context>

<pallas_src>
import jax
import jax.numpy as jnp
from jax.experimental import pallas as pl
from jax.experimental.pallas import tpu as pltpu

# ---------------- model dims (small image VAE) -------------------------------
N, C, H, W = 2, 4, 16, 16          # batch, channels, spatial
IN_F       = C * H * W             # 1024 flattened features
HID        = 256                   # encoder/decoder hidden width
LATENT     = 64                    # latent dim (real)
LATENT_PAD = 128                   # latent padded to one full 128-lane vreg


# ---------------- fused Pallas kernel ----------------------------------------
def vae_fused_kernel(x_ref, ew1_ref, eb1_ref, ewml_ref, ebml_ref,
                     eps_ref, dw1_ref, db1_ref, dw2_ref, db2_ref,
                     recon_ref, mulv_ref):
    # ---- encoder: h = relu(x @ W1 + b1)  (bf16 MXU, f32 accum/elementwise)
    x_bf = x_ref[...].astype(jnp.bfloat16)
    h = jnp.dot(x_bf, ew1_ref[...], preferred_element_type=jnp.float32)
    h = jnp.maximum(h + eb1_ref[...], 0.0)

    # ---- fused mu|logvar head: one matmul, (N, 2*LATENT_PAD) = (N, 256)
    #      mu (padded) in lanes 0-127, logvar (padded) in lanes 128-255.
    mulv = jnp.dot(h.astype(jnp.bfloat16), ewml_ref[...],
                   preferred_element_type=jnp.float32) + ebml_ref[...]
    mulv_ref[...] = mulv

    mu_p = mulv[:, :LATENT_PAD]        # lane-aligned vreg view
    logvar_p = mulv[:, LATENT_PAD:]    # lane-aligned vreg view

    # ---- reparameterization: z = mu + exp(logvar/2) * eps  (exp -> EUP)
    #      padded lanes: 0 + exp(0) * 0 = 0, so they stay exactly zero.
    z_p = mu_p + jnp.exp(logvar_p * 0.5) * eps_ref[...]

    # ---- decoder: h2 = relu(z @ W1 + b1); recon = sigmoid(h2 @ W2 + b2)
    #      dw1 rows 64-127 are zero, so padded z lanes contribute nothing.
    h2 = jnp.dot(z_p.astype(jnp.bfloat16), dw1_ref[...],
                 preferred_element_type=jnp.float32)
    h2 = jnp.maximum(h2 + db1_ref[...], 0.0)
    logits = jnp.dot(h2.astype(jnp.bfloat16), dw2_ref[...],
                     preferred_element_type=jnp.float32) + db2_ref[...]
    recon_ref[...] = jax.nn.sigmoid(logits)


# ---------------- pallas_call wrapper -----------------------------------------
def vae_forward(x_nchw, params, eps):
    """Exact VAE.forward: returns (reconstructed_x, mu, logvar)."""
    x_flat = x_nchw.reshape(N, IN_F)                          # NCHW flatten (glue)
    # eps padded to 128 lanes with zeros (inside jit -> fused by XLA).
    eps_p = jnp.pad(eps, ((0, 0), (0, LATENT_PAD - LATENT)))

    args = (x_flat,
            params["enc_w1"], params["enc_b1"],
            params["enc_wml"], params["enc_bml"],
            eps_p,
            params["dec_w1"], params["dec_b1"],
            params["dec_w2"], params["dec_b2"])

    vmem_spec = pl.BlockSpec(memory_space=pltpu.MemorySpace.VMEM)

    recon, mulv = pl.pallas_call(
        vae_fused_kernel,
        out_shape=(jax.ShapeDtypeStruct((N, IN_F), jnp.float32),
                   jax.ShapeDtypeStruct((N, 2 * LATENT_PAD), jnp.float32)),
        in_specs=[vmem_spec] * len(args),
        out_specs=(vmem_spec, vmem_spec),
    )(*args)

    reconstructed_x = recon.reshape(N, C, H, W)               # back to NCHW (glue)
    mu = mulv[:, :LATENT]
    logvar = mulv[:, LATENT_PAD:LATENT_PAD + LATENT]
    return reconstructed_x, mu, logvar


# ---------------- pure-JAX f32 reference (same bf16 weights) ------------------
def vae_forward_ref(x_nchw, params, eps):
    x = x_nchw.reshape(N, IN_F)
    h = jnp.maximum(x @ params["enc_w1"].astype(jnp.float32)
                    + params["enc_b1"], 0.0)
    mulv = h @ params["enc_wml"].astype(jnp.float32) + params["enc_bml"]
    mu = mulv[:, :LATENT]
    logvar = mulv[:, LATENT_PAD:LATENT_PAD + LATENT]
    z = mu + jnp.exp(logvar / 2.0) * eps
    dw1 = params["dec_w1"].astype(jnp.float32)[:LATENT]       # drop zero rows
    h2 = jnp.maximum(z @ dw1 + params["dec_b1"], 0.0)
    logits = h2 @ params["dec_w2"].astype(jnp.float32) + params["dec_b2"]
    return jax.nn.sigmoid(logits).reshape(N, C, H, W), mu, logvar


# ---------------- deterministic parameter init --------------------------------
def init_params(key):
    ks = jax.random.split(key, 5)
    s = 0.02
    w_mu = s * jax.random.normal(ks[1], (HID, LATENT), jnp.float32)
    w_lv = s * jax.random.normal(ks[2], (HID, LATENT), jnp.float32)
    zcols = jnp.zeros((HID, LATENT_PAD - LATENT), jnp.float32)
    # mu | pad | logvar | pad  -> (HID, 2*LATENT_PAD), lane-aligned halves.
    enc_wml = jnp.concatenate([w_mu, zcols, w_lv, zcols], axis=1)

    dec_w1_real = s * jax.random.normal(ks[3], (LATENT, HID), jnp.float32)
    dec_w1 = jnp.pad(dec_w1_real, ((0, LATENT_PAD - LATENT), (0, 0)))

    return {
        "enc_w1":  (s * jax.random.normal(ks[0], (IN_F, HID), jnp.float32)
                    ).astype(jnp.bfloat16),
        "enc_b1":  jnp.zeros((1, HID), jnp.float32),
        "enc_wml": enc_wml.astype(jnp.bfloat16),
        "enc_bml": jnp.zeros((1, 2 * LATENT_PAD), jnp.float32),
        "dec_w1":  dec_w1.astype(jnp.bfloat16),
        "dec_b1":  jnp.zeros((1, HID), jnp.float32),
        "dec_w2":  (s * jax.random.normal(ks[4], (HID, IN_F), jnp.float32)
                    ).astype(jnp.bfloat16),
        "dec_b2":  jnp.zeros((1, IN_F), jnp.float32),
    }


if __name__ == "__main__":
    key = jax.random.PRNGKey(0)
    k_x, k_eps, k_p = jax.random.split(key, 3)

    x = jax.random.normal(k_x, (N, C, H, W), jnp.float32)          # NCHW input
    # epsilon = randn_like(logvar); drawn deterministically outside the kernel
    eps = jax.random.normal(k_eps, (N, LATENT), jnp.float32)
    params = init_params(k_p)

    recon, mu, logvar = jax.jit(vae_forward)(x, params, eps)
    jax.block_until_ready((recon, mu, logvar))

    # shape / sanity checks
    assert recon.shape == (N, C, H, W)
    assert mu.shape == (N, LATENT) and logvar.shape == (N, LATENT)
    assert bool(jnp.all(jnp.isfinite(recon)))

    # correctness vs pure-f32 reference (bf16 activation casts -> loose tol)
    r_ref, mu_ref, lv_ref = vae_forward_ref(x, params, eps)
    assert bool(jnp.allclose(recon, r_ref, atol=3e-2, rtol=3e-2))
    assert bool(jnp.allclose(mu, mu_ref, atol=3e-2, rtol=3e-2))
    assert bool(jnp.allclose(logvar, lv_ref, atol=3e-2, rtol=3e-2))

    print("KERNEL_OK")
</pallas_src>

<mosaic_0001>
module attributes {stable_mosaic.version = 11 : i64} {
  func.func @vae_fused_kernel(%arg0: memref<2x1024xf32, #tpu.memory_space<vmem>>, %arg1: memref<1024x256xbf16, #tpu.memory_space<vmem>>, %arg2: memref<1x256xf32, #tpu.memory_space<vmem>>, %arg3: memref<256x256xbf16, #tpu.memory_space<vmem>>, %arg4: memref<1x256xf32, #tpu.memory_space<vmem>>, %arg5: memref<2x128xf32, #tpu.memory_space<vmem>>, %arg6: memref<128x256xbf16, #tpu.memory_space<vmem>>, %arg7: memref<1x256xf32, #tpu.memory_space<vmem>>, %arg8: memref<256x1024xbf16, #tpu.memory_space<vmem>>, %arg9: memref<1x1024xf32, #tpu.memory_space<vmem>>, %arg10: memref<2x1024xf32, #tpu.memory_space<vmem>>, %arg11: memref<2x256xf32, #tpu.memory_space<vmem>>) attributes {dimension_semantics = [], scalar_prefetch = 0 : i64, scratch_operands = 0 : i64, tpu.core_type = #tpu.core_type<tc>} {
    %c0 = arith.constant 0 : index
    %c0_0 = arith.constant 0 : index
    %0 = vector.load %arg0[%c0, %c0_0] : memref<2x1024xf32, #tpu.memory_space<vmem>>, vector<2x1024xf32>
    %1 = arith.truncf %0 : vector<2x1024xf32> to vector<2x1024xbf16>
    %c0_1 = arith.constant 0 : index
    %c0_2 = arith.constant 0 : index
    %2 = vector.load %arg1[%c0_1, %c0_2] : memref<1024x256xbf16, #tpu.memory_space<vmem>>, vector<1024x256xbf16>
    %cst = arith.constant dense<0.000000e+00> : vector<2x256xf32>
    %3 = tpu.matmul %1, %2, %cst {dimension_numbers = #tpu.dot_dimension_numbers<[1], [0], [0], [1], [0, 0, 1, 1], [], []>} : vector<2x1024xbf16>, vector<1024x256xbf16>, vector<2x256xf32> -> vector<2x256xf32>
    %c0_3 = arith.constant 0 : index
    %c0_4 = arith.constant 0 : index
    %4 = vector.load %arg2[%c0_3, %c0_4] : memref<1x256xf32, #tpu.memory_space<vmem>>, vector<1x256xf32>
    %5 = vector.broadcast %4 : vector<1x256xf32> to vector<2x256xf32>
    %6 = arith.addf %3, %5 : vector<2x256xf32>
    %cst_5 = arith.constant 0.000000e+00 : f32
    %7 = vector.broadcast %cst_5 : f32 to vector<2x256xf32>
    %8 = arith.maximumf %6, %7 : vector<2x256xf32>
    %9 = arith.truncf %8 : vector<2x256xf32> to vector<2x256xbf16>
    %c0_6 = arith.constant 0 : index
    %c0_7 = arith.constant 0 : index
    %10 = vector.load %arg3[%c0_6, %c0_7] : memref<256x256xbf16, #tpu.memory_space<vmem>>, vector<256x256xbf16>
    %cst_8 = arith.constant dense<0.000000e+00> : vector<2x256xf32>
    %11 = tpu.matmul %9, %10, %cst_8 {dimension_numbers = #tpu.dot_dimension_numbers<[1], [0], [0], [1], [0, 0, 1, 1], [], []>} : vector<2x256xbf16>, vector<256x256xbf16>, vector<2x256xf32> -> vector<2x256xf32>
    %c0_9 = arith.constant 0 : index
    %c0_10 = arith.constant 0 : index
    %12 = vector.load %arg4[%c0_9, %c0_10] : memref<1x256xf32, #tpu.memory_space<vmem>>, vector<1x256xf32>
    %13 = vector.broadcast %12 : vector<1x256xf32> to vector<2x256xf32>
    %14 = arith.addf %11, %13 : vector<2x256xf32>
    %c0_11 = arith.constant 0 : index
    %c0_12 = arith.constant 0 : index
    %15 = vector.load %arg11[%c0_11, %c0_12] : memref<2x256xf32, #tpu.memory_space<vmem>>, vector<2x256xf32>
    tpu.vector_store %arg11[%c0_11, %c0_12], %14 {strides = array<i32>} : memref<2x256xf32, #tpu.memory_space<vmem>>, vector<2x256xf32>,
    %16 = vector.extract_strided_slice %14 {offsets = [0, 0], sizes = [2, 128], strides = [1, 1]} : vector<2x256xf32> to vector<2x128xf32>
    %17 = vector.extract_strided_slice %14 {offsets = [0, 128], sizes = [2, 128], strides = [1, 1]} : vector<2x256xf32> to vector<2x128xf32>
    %cst_13 = arith.constant 5.000000e-01 : f32
    %18 = vector.broadcast %cst_13 : f32 to vector<2x128xf32>
    %19 = arith.mulf %17, %18 : vector<2x128xf32>
    %20 = math.exp %19 : vector<2x128xf32>
    %c0_14 = arith.constant 0 : index
    %c0_15 = arith.constant 0 : index
    %21 = vector.load %arg5[%c0_14, %c0_15] : memref<2x128xf32, #tpu.memory_space<vmem>>, vector<2x128xf32>
    %22 = arith.mulf %20, %21 : vector<2x128xf32>
    %23 = arith.addf %16, %22 : vector<2x128xf32>
    %24 = arith.truncf %23 : vector<2x128xf32> to vector<2x128xbf16>
    %c0_16 = arith.constant 0 : index
    %c0_17 = arith.constant 0 : index
    %25 = vector.load %arg6[%c0_16, %c0_17] : memref<128x256xbf16, #tpu.memory_space<vmem>>, vector<128x256xbf16>
    %cst_18 = arith.constant dense<0.000000e+00> : vector<2x256xf32>
    %26 = tpu.matmul %24, %25, %cst_18 {dimension_numbers = #tpu.dot_dimension_numbers<[1], [0], [0], [1], [0, 0, 1, 1], [], []>} : vector<2x128xbf16>, vector<128x256xbf16>, vector<2x256xf32> -> vector<2x256xf32>
    %c0_19 = arith.constant 0 : index
    %c0_20 = arith.constant 0 : index
    %27 = vector.load %arg7[%c0_19, %c0_20] : memref<1x256xf32, #tpu.memory_space<vmem>>, vector<1x256xf32>
    %28 = vector.broadcast %27 : vector<1x256xf32> to vector<2x256xf32>
    %29 = arith.addf %26, %28 : vector<2x256xf32>
    %cst_21 = arith.constant 0.000000e+00 : f32
    %30 = vector.broadcast %cst_21 : f32 to vector<2x256xf32>
    %31 = arith.maximumf %29, %30 : vector<2x256xf32>
    %32 = arith.truncf %31 : vector<2x256xf32> to vector<2x256xbf16>
    %c0_22 = arith.constant 0 : index
    %c0_23 = arith.constant 0 : index
    %33 = vector.load %arg8[%c0_22, %c0_23] : memref<256x1024xbf16, #tpu.memory_space<vmem>>, vector<256x1024xbf16>
    %cst_24 = arith.constant dense<0.000000e+00> : vector<2x1024xf32>
    %34 = tpu.matmul %32, %33, %cst_24 {dimension_numbers = #tpu.dot_dimension_numbers<[1], [0], [0], [1], [0, 0, 1, 1], [], []>} : vector<2x256xbf16>, vector<256x1024xbf16>, vector<2x1024xf32> -> vector<2x1024xf32>
    %c0_25 = arith.constant 0 : index
    %c0_26 = arith.constant 0 : index
    %35 = vector.load %arg9[%c0_25, %c0_26] : memref<1x1024xf32, #tpu.memory_space<vmem>>, vector<1x1024xf32>
    %36 = vector.broadcast %35 : vector<1x1024xf32> to vector<2x1024xf32>
    %37 = arith.addf %34, %36 : vector<2x1024xf32>
    %38 = arith.negf %37 : vector<2x1024xf32>
    %39 = math.exp %38 : vector<2x1024xf32>
    %cst_27 = arith.constant 1.000000e+00 : f32
    %40 = vector.broadcast %cst_27 : f32 to vector<2x1024xf32>
    %41 = arith.addf %40, %39 : vector<2x1024xf32>
    %42 = arith.divf %40, %41 : vector<2x1024xf32>
    %c0_28 = arith.constant 0 : index
    %c0_29 = arith.constant 0 : index
    %43 = vector.load %arg10[%c0_28, %c0_29] : memref<2x1024xf32, #tpu.memory_space<vmem>>, vector<2x1024xf32>
    tpu.vector_store %arg10[%c0_28, %c0_29], %42 {strides = array<i32>} : memref<2x1024xf32, #tpu.memory_space<vmem>>, vector<2x1024xf32>,
    return
  }
}

</mosaic_0001>

<llo_original>
// kernel: vae_forward.1
$region0: #{vae_forward.1}
  #allocation0 [shape = 'u32[]', space=smem, size = 0x4, offset = 0x4, fixed_abs, tag = 'smem constant byte address 0x4 - core index']
  #allocation1 [shape = 'u32[144,128]{1,0:T(1,128)}', space=vmem, size = 0x12000, scoped, tag = 'internal scratch']
  %s0 = inlined_call_operand.vmem [shape: f32[2,1024], index: 0, kind: input, shape index: {}]
  %s1 = inlined_call_operand.hbm [shape: bf16[1024,256], index: 1, kind: input, shape index: {}]
  %s2 = inlined_call_operand.vmem [shape: f32[1,256], index: 2, kind: input, shape index: {}]
  %s3 = inlined_call_operand.hbm [shape: bf16[256,256], index: 3, kind: input, shape index: {}]
  %s4 = inlined_call_operand.vmem [shape: f32[1,256], index: 4, kind: input, shape index: {}]
  %s5 = inlined_call_operand.vmem [shape: f32[2,128], index: 5, kind: input, shape index: {}]
  %s6 = inlined_call_operand.vmem [shape: bf16[128,256], index: 6, kind: input, shape index: {}]
  %s7 = inlined_call_operand.vmem [shape: f32[1,256], index: 7, kind: input, shape index: {}]
  %s8 = inlined_call_operand.hbm [shape: bf16[256,1024], index: 8, kind: input, shape index: {}]
  %s9 = inlined_call_operand.vmem [shape: f32[1,1024], index: 9, kind: input, shape index: {}]
  %s10 = inlined_call_operand.vmem [shape: f32[2,1024], index: 10, kind: output, shape index: {0}]
  %s11 = inlined_call_operand.vmem [shape: f32[2,256], index: 11, kind: output, shape index: {1}]
  %12 = xla_tuple %s10, %s11
  %s13 = sld [smem:[#allocation0]]
  $region70: #{vae_forward.1} parent=0
    _
  %s15 = ssub.s32 1, %s13
  %s16 = scalar_select 0, %s15, %s13
  $region1: #{vae_forward.1} parent=0
    #allocation2 [shape = 'u8[524288]{0}', space=vmem, size = 0x80000, scoped, tag = 'input window, operand 1, single buffered']
    #allocation3 [shape = 's32[1]{0}', space=sflag, size = 0x4, scoped, tag = 'scoped memory for vae_forward.1']
    #allocation4 [shape = 'u8[131072]{0}', space=vmem, size = 0x20000, scoped, tag = 'input window, operand 3, single buffered']
    #allocation5 [shape = 's32[1]{0}', space=sflag, size = 0x4, scoped, tag = 'scoped memory for vae_forward.1']
    #allocation6 [shape = 'u8[524288]{0}', space=vmem, size = 0x80000, scoped, tag = 'input window, operand 8, single buffered']
    %17 = vsyncpa [#allocation3], 0
    %18 = vsyncpa [#allocation5], 0
    // Predicated region
    $region2: #{vae_forward.1} parent=1 // pred_check
      _
    $region3: #{vae_forward.1} parent=1 // pred_check_branch
      %20 = sbr.rel (0) target = $region5
    $region4: #{vae_forward.1} parent=1 // pred_region
      _
    $region5: #{vae_forward.1} parent=1 // pred_fallthru
      _
    // Predicated region
    $region6: #{vae_forward.1} parent=1 // pred_check
      _
    $region7: #{vae_forward.1} parent=1 // pred_check_branch
      %22 = sbr.rel (0) target = $region9
    $region8: #{vae_forward.1} parent=1 // pred_region
      %s24 = ssub.s32 16384, 16384
      %25 = vsyncadd [#allocation3], %s24
      %s26 = sshll.u32 [#allocation2], 4
      %s27 = int_to_ptr.vmem [resolvable:$true] %s26
      %32 = dma.hbm_to_vmem [thread:$0]  %s1, 16384, %s27, [#allocation3], 128, 128, 8
    $region9: #{vae_forward.1} parent=1 // pred_fallthru
      _
    // Predicated region
    $region10: #{vae_forward.1} parent=1 // pred_check
      _
    $region11: #{vae_forward.1} parent=1 // pred_check_branch
      %34 = sbr.rel (0) target = $region13
    $region12: #{vae_forward.1} parent=1 // pred_region
      _
    $region13: #{vae_forward.1} parent=1 // pred_fallthru
      _
    // Predicated region
    $region14: #{vae_forward.1} parent=1 // pred_check
      _
    $region15: #{vae_forward.1} parent=1 // pred_check_branch
      %36 = sbr.rel (0) target = $region17
    $region16: #{vae_forward.1} parent=1 // pred_region
      %s38 = ssub.s32 4096, 4096
      %39 = vsyncadd [#allocation5], %s38
      %s40 = sshll.u32 [#allocation4], 4
      %s41 = int_to_ptr.vmem [resolvable:$true] %s40
      %46 = dma.hbm_to_vmem [thread:$0]  %s3, 4096, %s41, [#allocation5], 128, 128, 8
    $region17: #{vae_forward.1} parent=1 // pred_fallthru
      _
    // Predicated region
    $region18: #{vae_forward.1} parent=1 // pred_check
      _
    $region19: #{vae_forward.1} parent=1 // pred_check_branch
      %48 = sbr.rel (0) target = $region21
    $region20: #{vae_forward.1} parent=1 // pred_region
      _
    $region21: #{vae_forward.1} parent=1 // pred_fallthru
      _
    // Predicated region
    $region22: #{vae_forward.1} parent=1 // pred_check
      _
    $region23: #{vae_forward.1} parent=1 // pred_check_branch
      %50 = sbr.rel (0) target = $region25
    $region24: #{vae_forward.1} parent=1 // pred_region
      _
    $region25: #{vae_forward.1} parent=1 // pred_fallthru
      _
    // Predicated region
    $region26: #{vae_forward.1} parent=1 // pred_check
      _
    $region27: #{vae_forward.1} parent=1 // pred_check_branch
      %52 = sbr.rel (0) target = $region29
    $region28: #{vae_forward.1} parent=1 // pred_region
      _
    $region29: #{vae_forward.1} parent=1 // pred_fallthru
      _
    // Predicated region
    $region30: #{vae_forward.1} parent=1 // pred_check
      _
    $region31: #{vae_forward.1} parent=1 // pred_check_branch
      %54 = sbr.rel (0) target = $region33
    $region32: #{vae_forward.1} parent=1 // pred_region
      _
    $region33: #{vae_forward.1} parent=1 // pred_fallthru
      _
    // Predicated region
    $region34: #{vae_forward.1} parent=1 // pred_check
      _
    $region35: #{vae_forward.1} parent=1 // pred_check_branch
      %56 = sbr.rel (0) target = $region37
    $region36: #{vae_forward.1} parent=1 // pred_region
      %s58 = ssub.s32 16384, 16384
      %59 = vsyncadd [#allocation5], %s58
      %s60 = sshll.u32 [#allocation6], 4
      %s61 = int_to_ptr.vmem [resolvable:$true] %s60
      %66 = dma.hbm_to_vmem [thread:$0]  %s8, 16384, %s61, [#allocation5], 512, 512, 32
    $region37: #{vae_forward.1} parent=1 // pred_fallthru
      _
    // Predicated region
    $region38: #{vae_forward.1} parent=1 // pred_check
      _
    $region39: #{vae_forward.1} parent=1 // pred_check_branch
      %68 = sbr.rel (0) target = $region41
    $region40: #{vae_forward.1} parent=1 // pred_region
      _
    $region41: #{vae_forward.1} parent=1 // pred_fallthru
      _
    // Predicated region
    $region42: #{vae_forward.1} parent=1 // pred_check
      _
    $region43: #{vae_forward.1} parent=1 // pred_check_branch
      %70 = sbr.rel (0) target = $region45
    $region44: #{vae_forward.1} parent=1 // pred_region
      %71 = dma.done [#allocation3], 16384
    $region45: #{vae_forward.1} parent=1 // pred_fallthru
      _
    // Predicated region
    $region46: #{vae_forward.1} parent=1 // pred_check
      _
    $region47: #{vae_forward.1} parent=1 // pred_check_branch
      %73 = sbr.rel (0) target = $region49
    $region48: #{vae_forward.1} parent=1 // pred_region
      %74 = dma.done [#allocation5], 4096
    $region49: #{vae_forward.1} parent=1 // pred_fallthru
      _
    // Predicated region
    $region50: #{vae_forward.1} parent=1 // pred_check
      _
    $region51: #{vae_forward.1} parent=1 // pred_check_branch
      %76 = sbr.rel (0) target = $region53
    $region52: #{vae_forward.1} parent=1 // pred_region
      %77 = dma.done [#allocation5], 16384
    $region53: #{vae_forward.1} parent=1 // pred_fallthru
      _
    %v79 = vld [vmem:[%s0] sm:$0xff]
    %v80 = vld [vmem:[%s0 + $0x8] sm:$0xff]
    %v83 = vcombine.high %v79, %v79
    %v85 = vunpack.c.l.s4 1983009808
    %v86 = vunpack.c.0.s8 %v85
    %v87 = vlaneseq
    %v88 = vshrl.u32 %v87, 7
    %v89 = vsub.s32 %v86, %v88
    %v90 = vrot.slane %v79, %v89
    %v92 = vunpack.c.l.s4 1983009808
    %v93 = vunpack.c.0.s8 %v92
    %v94 = vlaneseq
    %v95 = vshrl.u32 %v94, 7
    %v96 = vsub.s32 %v93, %v95
    %v97 = vrot.slane %v83, %v96
    %v98 = vcombine.high %v90, %v90
    %v99 = vcombine.high %v97, %v97
    %v100 = vcombine.high %v80, %v80
    %v102 = vunpack.c.l.s4 1983009808
    %v103 = vunpack.c.0.s8 %v102
    %v104 = vlaneseq
    %v105 = vshrl.u32 %v104, 7
    %v106 = vsub.s32 %v103, %v105
    %v107 = vrot.slane %v80, %v106
    %v109 = vunpack.c.l.s4 1983009808
    %v110 = vunpack.c.0.s8 %v109
    %v111 = vlaneseq
    %v112 = vshrl.u32 %v111, 7
    %v113 = vsub.s32 %v110, %v112
    %v114 = vrot.slane %v100, %v113
    %v115 = vcombine.high %v107, %v107
    %v116 = vcombine.high %v114, %v114
    %v125 = vpack.c.bf16 %v90, %v90
    %v126 = vpack.c.bf16 %v98, %v98
    %v127 = vpack.c.bf16 %v97, %v97
    %v128 = vpack.c.bf16 %v99, %v99
    %v129 = vpack.c.bf16 %v107, %v107
    %v130 = vpack.c.bf16 %v115, %v115
    %v131 = vpack.c.bf16 %v114, %v114
    %v132 = vpack.c.bf16 %v116, %v116
    %v133 = vld [vmem:[#allocation2] sm:$0xff]
    %v134 = vld [vmem:[#allocation2 + $0x8] sm:$0xff]
    %v135 = vld [vmem:[#allocation2 + $0x10] sm:$0xff]
    %v136 = vld [vmem:[#allocation2 + $0x18] sm:$0xff]
    %v137 = vld [vmem:[#allocation2 + $0x20] sm:$0xff]
    %v138 = vld [vmem:[#allocation2 + $0x28] sm:$0xff]
    %v139 = vld [vmem:[#allocation2 + $0x30] sm:$0xff]
    %v140 = vld [vmem:[#allocation2 + $0x38] sm:$0xff]
    %v141 = vld [vmem:[#allocation2 + $0x40] sm:$0xff]
    %v142 = vld [vmem:[#allocation2 + $0x48] sm:$0xff]
    %v143 = vld [vmem:[#allocation2 + $0x50] sm:$0xff]
    %v144 = vld [vmem:[#allocation2 + $0x58] sm:$0xff]
    %v145 = vld [vmem:[#allocation2 + $0x60] sm:$0xff]
    %v146 = vld [vmem:[#allocation2 + $0x68] sm:$0xff]
    %v147 = vld [vmem:[#allocation2 + $0x70] sm:$0xff]
    %v148 = vld [vmem:[#allocation2 + $0x78] sm:$0xff]
    %v149 = vld [vmem:[#allocation2 + $0x80] sm:$0xff]
    %v150 = vld [vmem:[#allocation2 + $0x88] sm:$0xff]
    %v151 = vld [vmem:[#allocation2 + $0x90] sm:$0xff]
    %v152 = vld [vmem:[#allocation2 + $0x98] sm:$0xff]
    %v153 = vld [vmem:[#allocation2 + $0xa0] sm:$0xff]
    %v154 = vld [vmem:[#allocation2 + $0xa8] sm:$0xff]
    %v155 = vld [vmem:[#allocation2 + $0xb0] sm:$0xff]
    %v156 = vld [vmem:[#allocation2 + $0xb8] sm:$0xff]
    %v157 = vld [vmem:[#allocation2 + $0xc0] sm:$0xff]
    %v158 = vld [vmem:[#allocation2 + $0xc8] sm:$0xff]
    %v159 = vld [vmem:[#allocation2 + $0xd0] sm:$0xff]
    %v160 = vld [vmem:[#allocation2 + $0xd8] sm:$0xff]
    %v161 = vld [vmem:[#allocation2 + $0xe0] sm:$0xff]
    %v162 = vld [vmem:[#allocation2 + $0xe8] sm:$0xff]
    %v163 = vld [vmem:[#allocation2 + $0xf0] sm:$0xff]
    %v164 = vld [vmem:[#allocation2 + $0xf8] sm:$0xff]
    %v165 = vld [vmem:[#allocation2 + $0x100] sm:$0xff]
    %v166 = vld [vmem:[#allocation2 + $0x108] sm:$0xff]
    %v167 = vld [vmem:[#allocation2 + $0x110] sm:$0xff]
    %v168 = vld [vmem:[#allocation2 + $0x118] sm:$0xff]
    %v169 = vld [vmem:[#allocation2 + $0x120] sm:$0xff]
    %v170 = vld [vmem:[#allocation2 + $0x128] sm:$0xff]
    %v171 = vld [vmem:[#allocation2 + $0x130] sm:$0xff]
    %v172 = vld [vmem:[#allocation2 + $0x138] sm:$0xff]
    %v173 = vld [vmem:[#allocation2 + $0x140] sm:$0xff]
    %v174 = vld [vmem:[#allocation2 + $0x148] sm:$0xff]
    %v175 = vld [vmem:[#allocation2 + $0x150] sm:$0xff]
    %v176 = vld [vmem:[#allocation2 + $0x158] sm:$0xff]
    %v177 = vld [vmem:[#allocation2 + $0x160] sm:$0xff]
    %v178 = vld [vmem:[#allocation2 + $0x168] sm:$0xff]
    %v179 = vld [vmem:[#allocation2 + $0x170] sm:$0xff]
    %v180 = vld [vmem:[#allocation2 + $0x178] sm:$0xff]
    %v181 = vld [vmem:[#allocation2 + $0x180] sm:$0xff]
    %v182 = vld [vmem:[#allocation2 + $0x188] sm:$0xff]
    %v183 = vld [vmem:[#allocation2 + $0x190] sm:$0xff]
    %v184 = vld [vmem:[#allocation2 + $0x198] sm:$0xff]
    %v185 = vld [vmem:[#allocation2 + $0x1a0] sm:$0xff]
    %v186 = vld [vmem:[#allocation2 + $0x1a8] sm:$0xff]
    %v187 = vld [vmem:[#allocation2 + $0x1b0] sm:$0xff]
    %v188 = vld [vmem:[#allocation2 + $0x1b8] sm:$0xff]
    %v189 = vld [vmem:[#allocation2 + $0x1c0] sm:$0xff]
    %v190 = vld [vmem:[#allocation2 + $0x1c8] sm:$0xff]
    %v191 = vld [vmem:[#allocation2 + $0x1d0] sm:$0xff]
    %v192 = vld [vmem:[#allocation2 + $0x1d8] sm:$0xff]
    %v193 = vld [vmem:[#allocation2 + $0x1e0] sm:$0xff]
    %v194 = vld [vmem:[#allocation2 + $0x1e8] sm:$0xff]
    %v195 = vld [vmem:[#allocation2 + $0x1f0] sm:$0xff]
    %v196 = vld [vmem:[#allocation2 + $0x1f8] sm:$0xff]
    %v197 = vld [vmem:[#allocation2 + $0x200] sm:$0xff]
    %v198 = vld [vmem:[#allocation2 + $0x208] sm:$0xff]
    %v199 = vld [vmem:[#allocation2 + $0x210] sm:$0xff]
    %v200 = vld [vmem:[#allocation2 + $0x218] sm:$0xff]
    %v201 = vld [vmem:[#allocation2 + $0x220] sm:$0xff]
    %v202 = vld [vmem:[#allocation2 + $0x228] sm:$0xff]
    %v203 = vld [vmem:[#allocation2 + $0x230] sm:$0xff]
    %v204 = vld [vmem:[#allocation2 + $0x238] sm:$0xff]
    %v205 = vld [vmem:[#allocation2 + $0x240] sm:$0xff]
    %v206 = vld [vmem:[#allocation2 + $0x248] sm:$0xff]
    %v207 = vld [vmem:[#allocation2 + $0x250] sm:$0xff]
    %v208 = vld [vmem:[#allocation2 + $0x258] sm:$0xff]
    %v209 = vld [vmem:[#allocation2 + $0x260] sm:$0xff]
    %v210 = vld [vmem:[#allocation2 + $0x268] sm:$0xff]
    %v211 = vld [vmem:[#allocation2 + $0x270] sm:$0xff]
    %v212 = vld [vmem:[#allocation2 + $0x278] sm:$0xff]
    %v213 = vld [vmem:[#allocation2 + $0x280] sm:$0xff]
    %v214 = vld [vmem:[#allocation2 + $0x288] sm:$0xff]
    %v215 = vld [vmem:[#allocation2 + $0x290] sm:$0xff]
    %v216 = vld [vmem:[#allocation2 + $0x298] sm:$0xff]
    %v217 = vld [vmem:[#allocation2 + $0x2a0] sm:$0xff]
    %v218 = vld [vmem:[#allocation2 + $0x2a8] sm:$0xff]
    %v219 = vld [vmem:[#allocation2 + $0x2b0] sm:$0xff]
    %v220 = vld [vmem:[#allocation2 + $0x2b8] sm:$0xff]
    %v221 = vld [vmem:[#allocation2 + $0x2c0] sm:$0xff]
    %v222 = vld [vmem:[#allocation2 + $0x2c8] sm:$0xff]
    %v223 = vld [vmem:[#allocation2 + $0x2d0] sm:$0xff]
    %v224 = vld [vmem:[#allocation2 + $0x2d8] sm:$0xff]
    %v225 = vld [vmem:[#allocation2 + $0x2e0] sm:$0xff]
    %v226 = vld [vmem:[#allocation2 + $0x2e8] sm:$0xff]
    %v227 = vld [vmem:[#allocation2 + $0x2f0] sm:$0xff]
    %v228 = vld [vmem:[#allocation2 + $0x2f8] sm:$0xff]
    %v229 = vld [vmem:[#allocation2 + $0x300] sm:$0xff]
    %v230 = vld [vmem:[#allocation2 + $0x308] sm:$0xff]
    %v231 = vld [vmem:[#allocation2 + $0x310] sm:$0xff]
    %v232 = vld [vmem:[#allocation2 + $0x318] sm:$0xff]
    %v233 = vld [vmem:[#allocation2 + $0x320] sm:$0xff]
    %v234 = vld [vmem:[#allocation2 + $0x328] sm:$0xff]
    %v235 = vld [vmem:[#allocation2 + $0x330] sm:$0xff]
    %v236 = vld [vmem:[#allocation2 + $0x338] sm:$0xff]
    %v237 = vld [vmem:[#allocation2 + $0x340] sm:$0xff]
    %v238 = vld [vmem:[#allocation2 + $0x348] sm:$0xff]
    %v239 = vld [vmem:[#allocation2 + $0x350] sm:$0xff]
    %v240 = vld [vmem:[#allocation2 + $0x358] sm:$0xff]
    %v241 = vld [vmem:[#allocation2 + $0x360] sm:$0xff]
    %v242 = vld [vmem:[#allocation2 + $0x368] sm:$0xff]
    %v243 = vld [vmem:[#allocation2 + $0x370] sm:$0xff]
    %v244 = vld [vmem:[#allocation2 + $0x378] sm:$0xff]
    %v245 = vld [vmem:[#allocation2 + $0x380] sm:$0xff]
    %v246 = vld [vmem:[#allocation2 + $0x388] sm:$0xff]
    %v247 = vld [vmem:[#allocation2 + $0x390] sm:$0xff]
    %v248 = vld [vmem:[#allocation2 + $0x398] sm:$0xff]
    %v249 = vld [vmem:[#allocation2 + $0x3a0] sm:$0xff]
    %v250 = vld [vmem:[#allocation2 + $0x3a8] sm:$0xff]
    %v251 = vld [vmem:[#allocation2 + $0x3b0] sm:$0xff]
    %v252 = vld [vmem:[#allocation2 + $0x3b8] sm:$0xff]
    %v253 = vld [vmem:[#allocation2 + $0x3c0] sm:$0xff]
    %v254 = vld [vmem:[#allocation2 + $0x3c8] sm:$0xff]
    %v255 = vld [vmem:[#allocation2 + $0x3d0] sm:$0xff]
    %v256 = vld [vmem:[#allocation2 + $0x3d8] sm:$0xff]
    %v257 = vld [vmem:[#allocation2 + $0x3e0] sm:$0xff]
    %v258 = vld [vmem:[#allocation2 + $0x3e8] sm:$0xff]
    %v259 = vld [vmem:[#allocation2 + $0x3f0] sm:$0xff]
    %v260 = vld [vmem:[#allocation2 + $0x3f8] sm:$0xff]
    %v261 = vld [vmem:[%s2] sm:$0x3]
    %v263 = vlaneseq
    %v264 = vshrl.u32 %v263, 7
    %v265 = vsub.s32 0, %v264
    %v266 = vrot.slane %v261, %v265
    %v267 = vlaneseq
    %v268 = vshrl.u32 %v267, 7
    %v269 = vsub.s32 1, %v268
    %v270 = vrot.slane %v261, %v269
    %v401 = vunpack.c.l.b16 %v133
    %v402 = vunpack.c.h.b16 %v133
    %v403 = vunpack.c.l.b16 %v134
    %v404 = vunpack.c.h.b16 %v134
    %v405 = vunpack.c.l.b16 %v135
    %v406 = vunpack.c.h.b16 %v135
    %v407 = vunpack.c.l.b16 %v136
    %v408 = vunpack.c.h.b16 %v136
    %v409 = vunpack.c.l.b16 %v137
    %v410 = vunpack.c.h.b16 %v137
    %v411 = vunpack.c.l.b16 %v138
    %v412 = vunpack.c.h.b16 %v138
    %v413 = vunpack.c.l.b16 %v139
    %v414 = vunpack.c.h.b16 %v139
    %v415 = vunpack.c.l.b16 %v140
    %v416 = vunpack.c.h.b16 %v140
    %v417 = vunpack.c.l.b16 %v141
    %v418 = vunpack.c.h.b16 %v141
    %v419 = vunpack.c.l.b16 %v142
    %v420 = vunpack.c.h.b16 %v142
    %v421 = vunpack.c.l.b16 %v143
    %v422 = vunpack.c.h.b16 %v143
    %v423 = vunpack.c.l.b16 %v144
    %v424 = vunpack.c.h.b16 %v144
    %v425 = vunpack.c.l.b16 %v145
    %v426 = vunpack.c.h.b16 %v145
    %v427 = vunpack.c.l.b16 %v146
    %v428 = vunpack.c.h.b16 %v146
    %v429 = vunpack.c.l.b16 %v147
    %v430 = vunpack.c.h.b16 %v147
    %v431 = vunpack.c.l.b16 %v148
    %v432 = vunpack.c.h.b16 %v148
    %v433 = vunpack.c.l.b16 %v149
    %v434 = vunpack.c.h.b16 %v149
    %v435 = vunpack.c.l.b16 %v150
    %v436 = vunpack.c.h.b16 %v150
    %v437 = vunpack.c.l.b16 %v151
    %v438 = vunpack.c.h.b16 %v151
    %v439 = vunpack.c.l.b16 %v152
    %v440 = vunpack.c.h.b16 %v152
    %v441 = vunpack.c.l.b16 %v153
    %v442 = vunpack.c.h.b16 %v153
    %v443 = vunpack.c.l.b16 %v154
    %v444 = vunpack.c.h.b16 %v154
    %v445 = vunpack.c.l.b16 %v155
    %v446 = vunpack.c.h.b16 %v155
    %v447 = vunpack.c.l.b16 %v156
    %v448 = vunpack.c.h.b16 %v156
    %v449 = vunpack.c.l.b16 %v157
    %v450 = vunpack.c.h.b16 %v157
    %v451 = vunpack.c.l.b16 %v158
    %v452 = vunpack.c.h.b16 %v158
    %v453 = vunpack.c.l.b16 %v159
    %v454 = vunpack.c.h.b16 %v159
    %v455 = vunpack.c.l.b16 %v160
    %v456 = vunpack.c.h.b16 %v160
    %v457 = vunpack.c.l.b16 %v161
    %v458 = vunpack.c.h.b16 %v161
    %v459 = vunpack.c.l.b16 %v162
    %v460 = vunpack.c.h.b16 %v162
    %v461 = vunpack.c.l.b16 %v163
    %v462 = vunpack.c.h.b16 %v163
    %v463 = vunpack.c.l.b16 %v164
    %v464 = vunpack.c.h.b16 %v164
    %v465 = vunpack.c.l.b16 %v165
    %v466 = vunpack.c.h.b16 %v165
    %v467 = vunpack.c.l.b16 %v166
    %v468 = vunpack.c.h.b16 %v166
    %v469 = vunpack.c.l.b16 %v167
    %v470 = vunpack.c.h.b16 %v167
    %v471 = vunpack.c.l.b16 %v168
    %v472 = vunpack.c.h.b16 %v168
    %v473 = vunpack.c.l.b16 %v169
    %v474 = vunpack.c.h.b16 %v169
    %v475 = vunpack.c.l.b16 %v170
    %v476 = vunpack.c.h.b16 %v170
    %v477 = vunpack.c.l.b16 %v171
    %v478 = vunpack.c.h.b16 %v171
    %v479 = vunpack.c.l.b16 %v172
    %v480 = vunpack.c.h.b16 %v172
    %v481 = vunpack.c.l.b16 %v173
    %v482 = vunpack.c.h.b16 %v173
    %v483 = vunpack.c.l.b16 %v174
    %v484 = vunpack.c.h.b16 %v174
    %v485 = vunpack.c.l.b16 %v175
    %v486 = vunpack.c.h.b16 %v175
    %v487 = vunpack.c.l.b16 %v176
    %v488 = vunpack.c.h.b16 %v176
    %v489 = vunpack.c.l.b16 %v177
    %v490 = vunpack.c.h.b16 %v177
    %v491 = vunpack.c.l.b16 %v178
    %v492 = vunpack.c.h.b16 %v178
    %v493 = vunpack.c.l.b16 %v179
    %v494 = vunpack.c.h.b16 %v179
    %v495 = vunpack.c.l.b16 %v180
    %v496 = vunpack.c.h.b16 %v180
    %v497 = vunpack.c.l.b16 %v181
    %v498 = vunpack.c.h.b16 %v181
    %v499 = vunpack.c.l.b16 %v182
    %v500 = vunpack.c.h.b16 %v182
    %v501 = vunpack.c.l.b16 %v183
    %v502 = vunpack.c.h.b16 %v183
    %v503 = vunpack.c.l.b16 %v184
    %v504 = vunpack.c.h.b16 %v184
    %v505 = vunpack.c.l.b16 %v185
    %v506 = vunpack.c.h.b16 %v185
    %v507 = vunpack.c.l.b16 %v186
    %v508 = vunpack.c.h.b16 %v186
    %v509 = vunpack.c.l.b16 %v187
    %v510 = vunpack.c.h.b16 %v187
    %v511 = vunpack.c.l.b16 %v188
    %v512 = vunpack.c.h.b16 %v188
    %v513 = vunpack.c.l.b16 %v189
    %v514 = vunpack.c.h.b16 %v189
    %v515 = vunpack.c.l.b16 %v190
    %v516 = vunpack.c.h.b16 %v190
    %v517 = vunpack.c.l.b16 %v191
    %v518 = vunpack.c.h.b16 %v191
    %v519 = vunpack.c.l.b16 %v192
    %v520 = vunpack.c.h.b16 %v192
    %v521 = vunpack.c.l.b16 %v193
    %v522 = vunpack.c.h.b16 %v193
    %v523 = vunpack.c.l.b16 %v194
    %v524 = vunpack.c.h.b16 %v194
    %v525 = vunpack.c.l.b16 %v195
    %v526 = vunpack.c.h.b16 %v195
    %v527 = vunpack.c.l.b16 %v196
    %v528 = vunpack.c.h.b16 %v196
    %v529 = vunpack.c.l.b16 %v197
    %v530 = vunpack.c.h.b16 %v197
    %v531 = vunpack.c.l.b16 %v198
    %v532 = vunpack.c.h.b16 %v198
    %v533 = vunpack.c.l.b16 %v199
    %v534 = vunpack.c.h.b16 %v199
    %v535 = vunpack.c.l.b16 %v200
    %v536 = vunpack.c.h.b16 %v200
    %v537 = vunpack.c.l.b16 %v201
    %v538 = vunpack.c.h.b16 %v201
    %v539 = vunpack.c.l.b16 %v202
    %v540 = vunpack.c.h.b16 %v202
    %v541 = vunpack.c.l.b16 %v203
    %v542 = vunpack.c.h.b16 %v203
    %v543 = vunpack.c.l.b16 %v204
    %v544 = vunpack.c.h.b16 %v204
    %v545 = vunpack.c.l.b16 %v205
    %v546 = vunpack.c.h.b16 %v205
    %v547 = vunpack.c.l.b16 %v206
    %v548 = vunpack.c.h.b16 %v206
    %v549 = vunpack.c.l.b16 %v207
    %v550 = vunpack.c.h.b16 %v207
    %v551 = vunpack.c.l.b16 %v208
    %v552 = vunpack.c.h.b16 %v208
    %v553 = vunpack.c.l.b16 %v209
    %v554 = vunpack.c.h.b16 %v209
    %v555 = vunpack.c.l.b16 %v210
    %v556 = vunpack.c.h.b16 %v210
    %v557 = vunpack.c.l.b16 %v211
    %v558 = vunpack.c.h.b16 %v211
    %v559 = vunpack.c.l.b16 %v212
    %v560 = vunpack.c.h.b16 %v212
    %v561 = vunpack.c.l.b16 %v213
    %v562 = vunpack.c.h.b16 %v213
    %v563 = vunpack.c.l.b16 %v214
    %v564 = vunpack.c.h.b16 %v214
    %v565 = vunpack.c.l.b16 %v215
    %v566 = vunpack.c.h.b16 %v215
    %v567 = vunpack.c.l.b16 %v216
    %v568 = vunpack.c.h.b16 %v216
    %v569 = vunpack.c.l.b16 %v217
    %v570 = vunpack.c.h.b16 %v217
    %v571 = vunpack.c.l.b16 %v218
    %v572 = vunpack.c.h.b16 %v218
    %v573 = vunpack.c.l.b16 %v219
    %v574 = vunpack.c.h.b16 %v219
    %v575 = vunpack.c.l.b16 %v220
    %v576 = vunpack.c.h.b16 %v220
    %v577 = vunpack.c.l.b16 %v221
    %v578 = vunpack.c.h.b16 %v221
    %v579 = vunpack.c.l.b16 %v222
    %v580 = vunpack.c.h.b16 %v222
    %v581 = vunpack.c.l.b16 %v223
    %v582 = vunpack.c.h.b16 %v223
    %v583 = vunpack.c.l.b16 %v224
    %v584 = vunpack.c.h.b16 %v224
    %v585 = vunpack.c.l.b16 %v225
    %v586 = vunpack.c.h.b16 %v225
    %v587 = vunpack.c.l.b16 %v226
    %v588 = vunpack.c.h.b16 %v226
    %v589 = vunpack.c.l.b16 %v227
    %v590 = vunpack.c.h.b16 %v227
    %v591 = vunpack.c.l.b16 %v228
    %v592 = vunpack.c.h.b16 %v228
    %v593 = vunpack.c.l.b16 %v229
    %v594 = vunpack.c.h.b16 %v229
    %v595 = vunpack.c.l.b16 %v230
    %v596 = vunpack.c.h.b16 %v230
    %v597 = vunpack.c.l.b16 %v231
    %v598 = vunpack.c.h.b16 %v231
    %v599 = vunpack.c.l.b16 %v232
    %v600 = vunpack.c.h.b16 %v232
    %v601 = vunpack.c.l.b16 %v233
    %v602 = vunpack.c.h.b16 %v233
    %v603 = vunpack.c.l.b16 %v234
    %v604 = vunpack.c.h.b16 %v234
    %v605 = vunpack.c.l.b16 %v235
    %v606 = vunpack.c.h.b16 %v235
    %v607 = vunpack.c.l.b16 %v236
    %v608 = vunpack.c.h.b16 %v236
    %v609 = vunpack.c.l.b16 %v237
    %v610 = vunpack.c.h.b16 %v237
    %v611 = vunpack.c.l.b16 %v238
    %v612 = vunpack.c.h.b16 %v238
    %v613 = vunpack.c.l.b16 %v239
    %v614 = vunpack.c.h.b16 %v239
    %v615 = vunpack.c.l.b16 %v240
    %v616 = vunpack.c.h.b16 %v240
    %v617 = vunpack.c.l.b16 %v241
    %v618 = vunpack.c.h.b16 %v241
    %v619 = vunpack.c.l.b16 %v242
    %v620 = vunpack.c.h.b16 %v242
    %v621 = vunpack.c.l.b16 %v243
    %v622 = vunpack.c.h.b16 %v243
    %v623 = vunpack.c.l.b16 %v244
    %v624 = vunpack.c.h.b16 %v244
    %v625 = vunpack.c.l.b16 %v245
    %v626 = vunpack.c.h.b16 %v245
    %v627 = vunpack.c.l.b16 %v246
    %v628 = vunpack.c.h.b16 %v246
    %v629 = vunpack.c.l.b16 %v247
    %v630 = vunpack.c.h.b16 %v247
    %v631 = vunpack.c.l.b16 %v248
    %v632 = vunpack.c.h.b16 %v248
    %v633 = vunpack.c.l.b16 %v249
    %v634 = vunpack.c.h.b16 %v249
    %v635 = vunpack.c.l.b16 %v250
    %v636 = vunpack.c.h.b16 %v250
    %v637 = vunpack.c.l.b16 %v251
    %v638 = vunpack.c.h.b16 %v251
    %v639 = vunpack.c.l.b16 %v252
    %v640 = vunpack.c.h.b16 %v252
    %v641 = vunpack.c.l.b16 %v253
    %v642 = vunpack.c.h.b16 %v253
    %v643 = vunpack.c.l.b16 %v254
    %v644 = vunpack.c.h.b16 %v254
    %v645 = vunpack.c.l.b16 %v255
    %v646 = vunpack.c.h.b16 %v255
    %v647 = vunpack.c.l.b16 %v256
    %v648 = vunpack.c.h.b16 %v256
    %v649 = vunpack.c.l.b16 %v257
    %v650 = vunpack.c.h.b16 %v257
    %v651 = vunpack.c.l.b16 %v258
    %v652 = vunpack.c.h.b16 %v258
    %v653 = vunpack.c.l.b16 %v259
    %v654 = vunpack.c.h.b16 %v259
    %v655 = vunpack.c.l.b16 %v260
    %v656 = vunpack.c.h.b16 %v260
    %v657 = vpack.c.b16 %v403, %v401
    %v658 = vpack.c.b16 %v404, %v402
    %v659 = vpack.c.b16 %v407, %v405
    %v660 = vpack.c.b16 %v408, %v406
    %v661 = vpack.c.b16 %v411, %v409
    %v662 = vpack.c.b16 %v412, %v410
    %v663 = vpack.c.b16 %v415, %v413
    %v664 = vpack.c.b16 %v416, %v414
    %v665 = vpack.c.b16 %v419, %v417
    %v666 = vpack.c.b16 %v420, %v418
    %v667 = vpack.c.b16 %v423, %v421
    %v668 = vpack.c.b16 %v424, %v422
    %v669 = vpack.c.b16 %v427, %v425
    %v670 = vpack.c.b16 %v428, %v426
    %v671 = vpack.c.b16 %v431, %v429
    %v672 = vpack.c.b16 %v432, %v430
    %v673 = vpack.c.b16 %v435, %v433
    %v674 = vpack.c.b16 %v436, %v434
    %v675 = vpack.c.b16 %v439, %v437
    %v676 = vpack.c.b16 %v440, %v438
    %v677 = vpack.c.b16 %v443, %v441
    %v678 = vpack.c.b16 %v444, %v442
    %v679 = vpack.c.b16 %v447, %v445
    %v680 = vpack.c.b16 %v448, %v446
    %v681 = vpack.c.b16 %v451, %v449
    %v682 = vpack.c.b16 %v452, %v450
    %v683 = vpack.c.b16 %v455, %v453
    %v684 = vpack.c.b16 %v456, %v454
    %v685 = vpack.c.b16 %v459, %v457
    %v686 = vpack.c.b16 %v460, %v458
    %v687 = vpack.c.b16 %v463, %v461
    %v688 = vpack.c.b16 %v464, %v462
    %v689 = vpack.c.b16 %v467, %v465
    %v690 = vpack.c.b16 %v468, %v466
    %v691 = vpack.c.b16 %v471, %v469
    %v692 = vpack.c.b16 %v472, %v470
    %v693 = vpack.c.b16 %v475, %v473
    %v694 = vpack.c.b16 %v476, %v474
    %v695 = vpack.c.b16 %v479, %v477
    %v696 = vpack.c.b16 %v480, %v478
    %v697 = vpack.c.b16 %v483, %v481
    %v698 = vpack.c.b16 %v484, %v482
    %v699 = vpack.c.b16 %v487, %v485
    %v700 = vpack.c.b16 %v488, %v486
    %v701 = vpack.c.b16 %v491, %v489
    %v702 = vpack.c.b16 %v492, %v490
    %v703 = vpack.c.b16 %v495, %v493
    %v704 = vpack.c.b16 %v496, %v494
    %v705 = vpack.c.b16 %v499, %v497
    %v706 = vpack.c.b16 %v500, %v498
    %v707 = vpack.c.b16 %v503, %v501
    %v708 = vpack.c.b16 %v504, %v502
    %v709 = vpack.c.b16 %v507, %v505
    %v710 = vpack.c.b16 %v508, %v506
    %v711 = vpack.c.b16 %v511, %v509
    %v712 = vpack.c.b16 %v512, %v510
    %v713 = vpack.c.b16 %v515, %v513
    %v714 = vpack.c.b16 %v516, %v514
    %v715 = vpack.c.b16 %v519, %v517
    %v716 = vpack.c.b16 %v520, %v518
    %v717 = vpack.c.b16 %v523, %v521
    %v718 = vpack.c.b16 %v524, %v522
    %v719 = vpack.c.b16 %v527, %v525
    %v720 = vpack.c.b16 %v528, %v526
    %v721 = vpack.c.b16 %v531, %v529
    %v722 = vpack.c.b16 %v532, %v530
    %v723 = vpack.c.b16 %v535, %v533
    %v724 = vpack.c.b16 %v536, %v534
    %v725 = vpack.c.b16 %v539, %v537
    %v726 = vpack.c.b16 %v540, %v538
    %v727 = vpack.c.b16 %v543, %v541
    %v728 = vpack.c.b16 %v544, %v542
    %v729 = vpack.c.b16 %v547, %v545
    %v730 = vpack.c.b16 %v548, %v546
    %v731 = vpack.c.b16 %v551, %v549
    %v732 = vpack.c.b16 %v552, %v550
    %v733 = vpack.c.b16 %v555, %v553
    %v734 = vpack.c.b16 %v556, %v554
    %v735 = vpack.c.b16 %v559, %v557
    %v736 = vpack.c.b16 %v560, %v558
    %v737 = vpack.c.b16 %v563, %v561
    %v738 = vpack.c.b16 %v564, %v562
    %v739 = vpack.c.b16 %v567, %v565
    %v740 = vpack.c.b16 %v568, %v566
    %v741 = vpack.c.b16 %v571, %v569
    %v742 = vpack.c.b16 %v572, %v570
    %v743 = vpack.c.b16 %v575, %v573
    %v744 = vpack.c.b16 %v576, %v574
    %v745 = vpack.c.b16 %v579, %v577
    %v746 = vpack.c.b16 %v580, %v578
    %v747 = vpack.c.b16 %v583, %v581
    %v748 = vpack.c.b16 %v584, %v582
    %v749 = vpack.c.b16 %v587, %v585
    %v750 = vpack.c.b16 %v588, %v586
    %v751 = vpack.c.b16 %v591, %v589
    %v752 = vpack.c.b16 %v592, %v590
    %v753 = vpack.c.b16 %v595, %v593
    %v754 = vpack.c.b16 %v596, %v594
    %v755 = vpack.c.b16 %v599, %v597
    %v756 = vpack.c.b16 %v600, %v598
    %v757 = vpack.c.b16 %v603, %v601
    %v758 = vpack.c.b16 %v604, %v602
    %v759 = vpack.c.b16 %v607, %v605
    %v760 = vpack.c.b16 %v608, %v606
    %v761 = vpack.c.b16 %v611, %v609
    %v762 = vpack.c.b16 %v612, %v610
    %v763 = vpack.c.b16 %v615, %v613
    %v764 = vpack.c.b16 %v616, %v614
    %v765 = vpack.c.b16 %v619, %v617
    %v766 = vpack.c.b16 %v620, %v618
    %v767 = vpack.c.b16 %v623, %v621
    %v768 = vpack.c.b16 %v624, %v622
    %v769 = vpack.c.b16 %v627, %v625
    %v770 = vpack.c.b16 %v628, %v626
    %v771 = vpack.c.b16 %v631, %v629
    %v772 = vpack.c.b16 %v632, %v630
    %v773 = vpack.c.b16 %v635, %v633
    %v774 = vpack.c.b16 %v636, %v634
    %v775 = vpack.c.b16 %v639, %v637
    %v776 = vpack.c.b16 %v640, %v638
    %v777 = vpack.c.b16 %v643, %v641
    %v778 = vpack.c.b16 %v644, %v642
    %v779 = vpack.c.b16 %v647, %v645
    %v780 = vpack.c.b16 %v648, %v646
    %v781 = vpack.c.b16 %v651, %v649
    %v782 = vpack.c.b16 %v652, %v650
    %v783 = vpack.c.b16 %v655, %v653
    %v784 = vpack.c.b16 %v656, %v654
    %913 = vmatprep.subr.bf16.mxu0 %v658
    %914 = vmatpush1.bf16.msra.mxu0 %v657
    %915 = vmatprep.subr.bf16.mxu0 %v660
    %916 = vmatpush1.bf16.msra.mxu0 %v659
    %917 = vmatprep.subr.bf16.mxu0 %v662
    %918 = vmatpush1.bf16.msra.mxu0 %v661
    %919 = vmatprep.subr.bf16.mxu0 %v664
    %920 = vmatpush1.bf16.msra.mxu0 %v663
    %921 = vmatprep.subr.bf16.mxu0 %v666
    %922 = vmatpush1.bf16.msra.mxu0 %v665
    %923 = vmatprep.subr.bf16.mxu0 %v668
    %924 = vmatpush1.bf16.msra.mxu0 %v667
    %925 = vmatprep.subr.bf16.mxu0 %v670
    %926 = vmatpush1.bf16.msra.mxu0 %v669
    %927 = vmatprep.subr.bf16.mxu0 %v672
    %928 = vmatpush1.bf16.msra.mxu0 %v671
    %929 = vmatprep.subr.bf16.mxu0 %v674
    %930 = vmatpush1.bf16.msra.mxu0 %v673
    %931 = vmatprep.subr.bf16.mxu0 %v676
    %932 = vmatpush1.bf16.msra.mxu0 %v675
    %933 = vmatprep.subr.bf16.mxu0 %v678
    %934 = vmatpush1.bf16.msra.mxu0 %v677
    %935 = vmatprep.subr.bf16.mxu0 %v680
    %936 = vmatpush1.bf16.msra.mxu0 %v679
    %937 = vmatprep.subr.bf16.mxu0 %v682
    %938 = vmatpush1.bf16.msra.mxu0 %v681
    %939 = vmatprep.subr.bf16.mxu0 %v684
    %940 = vmatpush1.bf16.msra.mxu0 %v683
    %941 = vmatprep.subr.bf16.mxu0 %v686
    %942 = vmatpush1.bf16.msra.mxu0 %v685
    %943 = vmatprep.subr.bf16.mxu0 %v688
    %944 = vmatpush1.bf16.msra.mxu0 %v687
    %945 = vmatprep.mubr.bf16.mxu0 %v126
    %946 = vmatmul.mubr.bf16.gmra.mrb[0].mxu0 %v125
    %v947 = vpop.f32.mrb[0].mxu0
    %v948 = vadd.f32 %v266, %v947
    %v949 = vpop.f32.mrb[0].mxu0
    %v950 = vadd.f32 %v270, %v949
    %v951 = vpop.f32.mrb[0].mxu0
    %v952 = vpop.f32.mrb[0].mxu0
    %953 = vdwg.mxu0
    %954 = vmatprep.subr.bf16.mxu0 %v690
    %955 = vmatpush1.bf16.msra.mxu0 %v689
    %956 = vmatprep.subr.bf16.mxu0 %v692
    %957 = vmatpush1.bf16.msra.mxu0 %v691
    %958 = vmatprep.subr.bf16.mxu0 %v694
    %959 = vmatpush1.bf16.msra.mxu0 %v693
    %960 = vmatprep.subr.bf16.mxu0 %v696
    %961 = vmatpush1.bf16.msra.mxu0 %v695
    %962 = vmatprep.subr.bf16.mxu0 %v698
    %963 = vmatpush1.bf16.msra.mxu0 %v697
    %964 = vmatprep.subr.bf16.mxu0 %v700
    %965 = vmatpush1.bf16.msra.mxu0 %v699
    %966 = vmatprep.subr.bf16.mxu0 %v702
    %967 = vmatpush1.bf16.msra.mxu0 %v701
    %968 = vmatprep.subr.bf16.mxu0 %v704
    %969 = vmatpush1.bf16.msra.mxu0 %v703
    %970 = vmatprep.subr.bf16.mxu0 %v706
    %971 = vmatpush1.bf16.msra.mxu0 %v705
    %972 = vmatprep.subr.bf16.mxu0 %v708
    %973 = vmatpush1.bf16.msra.mxu0 %v707
    %974 = vmatprep.subr.bf16.mxu0 %v710
    %975 = vmatpush1.bf16.msra.mxu0 %v709
    %976 = vmatprep.subr.bf16.mxu0 %v712
    %977 = vmatpush1.bf16.msra.mxu0 %v711
    %978 = vmatprep.subr.bf16.mxu0 %v714
    %979 = vmatpush1.bf16.msra.mxu0 %v713
    %980 = vmatprep.subr.bf16.mxu0 %v716
    %981 = vmatpush1.bf16.msra.mxu0 %v715
    %982 = vmatprep.subr.bf16.mxu0 %v718
    %983 = vmatpush1.bf16.msra.mxu0 %v717
    %984 = vmatprep.subr.bf16.mxu0 %v720
    %985 = vmatpush1.bf16.msra.mxu0 %v719
    %986 = vmatprep.mubr.bf16.mxu0 %v128
    %987 = vmatmul.mubr.bf16.gmra.mrb[0].mxu0 %v127
    %v988 = vpop.f32.mrb[0].mxu0
    %v989 = vadd.f32 %v948, %v988
    %v990 = vpop.f32.mrb[0].mxu0
    %v991 = vadd.f32 %v950, %v990
    %v992 = vpop.f32.mrb[0].mxu0
    %v993 = vpop.f32.mrb[0].mxu0
    %994 = vdwg.mxu0
    %995 = vmatprep.subr.bf16.mxu0 %v722
    %996 = vmatpush1.bf16.msra.mxu0 %v721
    %997 = vmatprep.subr.bf16.mxu0 %v724
    %998 = vmatpush1.bf16.msra.mxu0 %v723
    %999 = vmatprep.subr.bf16.mxu0 %v726
    %1000 = vmatpush1.bf16.msra.mxu0 %v725
    %1001 = vmatprep.subr.bf16.mxu0 %v728
    %1002 = vmatpush1.bf16.msra.mxu0 %v727
    %1003 = vmatprep.subr.bf16.mxu0 %v730
    %1004 = vmatpush1.bf16.msra.mxu0 %v729
    %1005 = vmatprep.subr.bf16.mxu0 %v732
    %1006 = vmatpush1.bf16.msra.mxu0 %v731
    %1007 = vmatprep.subr.bf16.mxu0 %v734
    %1008 = vmatpush1.bf16.msra.mxu0 %v733
    %1009 = vmatprep.subr.bf16.mxu0 %v736
    %1010 = vmatpush1.bf16.msra.mxu0 %v735
    %1011 = vmatprep.subr.bf16.mxu0 %v738
    %1012 = vmatpush1.bf16.msra.mxu0 %v737
    %1013 = vmatprep.subr.bf16.mxu0 %v740
    %1014 = vmatpush1.bf16.msra.mxu0 %v739
    %1015 = vmatprep.subr.bf16.mxu0 %v742
    %1016 = vmatpush1.bf16.msra.mxu0 %v741
    %1017 = vmatprep.subr.bf16.mxu0 %v744
    %1018 = vmatpush1.bf16.msra.mxu0 %v743
    %1019 = vmatprep.subr.bf16.mxu0 %v746
    %1020 = vmatpush1.bf16.msra.mxu0 %v745
    %1021 = vmatprep.subr.bf16.mxu0 %v748
    %1022 = vmatpush1.bf16.msra.mxu0 %v747
    %1023 = vmatprep.subr.bf16.mxu0 %v750
    %1024 = vmatpush1.bf16.msra.mxu0 %v749
    %1025 = vmatprep.subr.bf16.mxu0 %v752
    %1026 = vmatpush1.bf16.msra.mxu0 %v751
    %1027 = vmatprep.mubr.bf16.mxu0 %v130
    %1028 = vmatmul.mubr.bf16.gmra.mrb[0].mxu0 %v129
    %v1029 = vpop.f32.mrb[0].mxu0
    %v1030 = vadd.f32 %v989, %v1029
    %v1031 = vpop.f32.mrb[0].mxu0
    %v1032 = vadd.f32 %v991, %v1031
    %v1033 = vpop.f32.mrb[0].mxu0
    %v1034 = vpop.f32.mrb[0].mxu0
    %1035 = vdwg.mxu0
    %1036 = vmatprep.subr.bf16.mxu0 %v754
    %1037 = vmatpush1.bf16.msra.mxu0 %v753
    %1038 = vmatprep.subr.bf16.mxu0 %v756
    %1039 = vmatpush1.bf16.msra.mxu0 %v755
    %1040 = vmatprep.subr.bf16.mxu0 %v758
    %1041 = vmatpush1.bf16.msra.mxu0 %v757
    %1042 = vmatprep.subr.bf16.mxu0 %v760
    %1043 = vmatpush1.bf16.msra.mxu0 %v759
    %1044 = vmatprep.subr.bf16.mxu0 %v762
    %1045 = vmatpush1.bf16.msra.mxu0 %v761
    %1046 = vmatprep.subr.bf16.mxu0 %v764
    %1047 = vmatpush1.bf16.msra.mxu0 %v763
    %1048 = vmatprep.subr.bf16.mxu0 %v766
    %1049 = vmatpush1.bf16.msra.mxu0 %v765
    %1050 = vmatprep.subr.bf16.mxu0 %v768
    %1051 = vmatpush1.bf16.msra.mxu0 %v767
    %1052 = vmatprep.subr.bf16.mxu0 %v770
    %1053 = vmatpush1.bf16.msra.mxu0 %v769
    %1054 = vmatprep.subr.bf16.mxu0 %v772
    %1055 = vmatpush1.bf16.msra.mxu0 %v771
    %1056 = vmatprep.subr.bf16.mxu0 %v774
    %1057 = vmatpush1.bf16.msra.mxu0 %v773
    %1058 = vmatprep.subr.bf16.mxu0 %v776
    %1059 = vmatpush1.bf16.msra.mxu0 %v775
    %1060 = vmatprep.subr.bf16.mxu0 %v778
    %1061 = vmatpush1.bf16.msra.mxu0 %v777
    %1062 = vmatprep.subr.bf16.mxu0 %v780
    %1063 = vmatpush1.bf16.msra.mxu0 %v779
    %1064 = vmatprep.subr.bf16.mxu0 %v782
    %1065 = vmatpush1.bf16.msra.mxu0 %v781
    %1066 = vmatprep.subr.bf16.mxu0 %v784
    %1067 = vmatpush1.bf16.msra.mxu0 %v783
    %1068 = vmatprep.mubr.bf16.mxu0 %v132
    %1069 = vmatmul.mubr.bf16.gmra.mrb[0].mxu0 %v131
    %v1070 = vpop.f32.mrb[0].mxu0
    %v1071 = vadd.f32 %v1030, %v1070
    %v1072 = vpop.f32.mrb[0].mxu0
    %v1073 = vadd.f32 %v1032, %v1072
    %v1074 = vpop.f32.mrb[0].mxu0
    %v1075 = vpop.f32.mrb[0].mxu0
    %1076 = vdwg.mxu0
    %v1077 = vmax.f32 %v1071, 0.0
    %v1078 = vmax.f32 %v1073, 0.0
    %v1079 = vpack.c.bf16 %v1077, %v1077
    %v1080 = vpack.c.bf16 %v1078, %v1078
    %v1081 = vld [vmem:[#allocation4] sm:$0xff]
    %v1082 = vld [vmem:[#allocation4 + $0x8] sm:$0xff]
    %v1083 = vld [vmem:[#allocation4 + $0x10] sm:$0xff]
    %v1084 = vld [vmem:[#allocation4 + $0x18] sm:$0xff]
    %v1085 = vld [vmem:[#allocation4 + $0x20] sm:$0xff]
    %v1086 = vld [vmem:[#allocation4 + $0x28] sm:$0xff]
    %v1087 = vld [vmem:[#allocation4 + $0x30] sm:$0xff]
    %v1088 = vld [vmem:[#allocation4 + $0x38] sm:$0xff]
    %v1089 = vld [vmem:[#allocation4 + $0x40] sm:$0xff]
    %v1090 = vld [vmem:[#allocation4 + $0x48] sm:$0xff]
    %v1091 = vld [vmem:[#allocation4 + $0x50] sm:$0xff]
    %v1092 = vld [vmem:[#allocation4 + $0x58] sm:$0xff]
    %v1093 = vld [vmem:[#allocation4 + $0x60] sm:$0xff]
    %v1094 = vld [vmem:[#allocation4 + $0x68] sm:$0xff]
    %v1095 = vld [vmem:[#allocation4 + $0x70] sm:$0xff]
    %v1096 = vld [vmem:[#allocation4 + $0x78] sm:$0xff]
    %v1097 = vld [vmem:[#allocation4 + $0x80] sm:$0xff]
    %v1098 = vld [vmem:[#allocation4 + $0x88] sm:$0xff]
    %v1099 = vld [vmem:[#allocation4 + $0x90] sm:$0xff]
    %v1100 = vld [vmem:[#allocation4 + $0x98] sm:$0xff]
    %v1101 = vld [vmem:[#allocation4 + $0xa0] sm:$0xff]
    %v1102 = vld [vmem:[#allocation4 + $0xa8] sm:$0xff]
    %v1103 = vld [vmem:[#allocation4 + $0xb0] sm:$0xff]
    %v1104 = vld [vmem:[#allocation4 + $0xb8] sm:$0xff]
    %v1105 = vld [vmem:[#allocation4 + $0xc0] sm:$0xff]
    %v1106 = vld [vmem:[#allocation4 + $0xc8] sm:$0xff]
    %v1107 = vld [vmem:[#allocation4 + $0xd0] sm:$0xff]
    %v1108 = vld [vmem:[#allocation4 + $0xd8] sm:$0xff]
    %v1109 = vld [vmem:[#allocation4 + $0xe0] sm:$0xff]
    %v1110 = vld [vmem:[#allocation4 + $0xe8] sm:$0xff]
    %v1111 = vld [vmem:[#allocation4 + $0xf0] sm:$0xff]
    %v1112 = vld [vmem:[#allocation4 + $0xf8] sm:$0xff]
    %v1113 = vld [vmem:[%s4] sm:$0x3]
    %v1115 = vlaneseq
    %v1116 = vshrl.u32 %v1115, 7
    %v1117 = vsub.s32 0, %v1116
    %v1118 = vrot.slane %v1113, %v1117
    %v1119 = vlaneseq
    %v1120 = vshrl.u32 %v1119, 7
    %v1121 = vsub.s32 1, %v1120
    %v1122 = vrot.slane %v1113, %v1121
    %v1157 = vunpack.c.l.b16 %v1081
    %v1158 = vunpack.c.h.b16 %v1081
    %v1159 = vunpack.c.l.b16 %v1082
    %v1160 = vunpack.c.h.b16 %v1082
    %v1161 = vunpack.c.l.b16 %v1083
    %v1162 = vunpack.c.h.b16 %v1083
    %v1163 = vunpack.c.l.b16 %v1084
    %v1164 = vunpack.c.h.b16 %v1084
    %v1165 = vunpack.c.l.b16 %v1085
    %v1166 = vunpack.c.h.b16 %v1085
    %v1167 = vunpack.c.l.b16 %v1086
    %v1168 = vunpack.c.h.b16 %v1086
    %v1169 = vunpack.c.l.b16 %v1087
    %v1170 = vunpack.c.h.b16 %v1087
    %v1171 = vunpack.c.l.b16 %v1088
    %v1172 = vunpack.c.h.b16 %v1088
    %v1173 = vunpack.c.l.b16 %v1089
    %v1174 = vunpack.c.h.b16 %v1089
    %v1175 = vunpack.c.l.b16 %v1090
    %v1176 = vunpack.c.h.b16 %v1090
    %v1177 = vunpack.c.l.b16 %v1091
    %v1178 = vunpack.c.h.b16 %v1091
    %v1179 = vunpack.c.l.b16 %v1092
    %v1180 = vunpack.c.h.b16 %v1092
    %v1181 = vunpack.c.l.b16 %v1093
    %v1182 = vunpack.c.h.b16 %v1093
    %v1183 = vunpack.c.l.b16 %v1094
    %v1184 = vunpack.c.h.b16 %v1094
    %v1185 = vunpack.c.l.b16 %v1095
    %v1186 = vunpack.c.h.b16 %v1095
    %v1187 = vunpack.c.l.b16 %v1096
    %v1188 = vunpack.c.h.b16 %v1096
    %v1189 = vunpack.c.l.b16 %v1097
    %v1190 = vunpack.c.h.b16 %v1097
    %v1191 = vunpack.c.l.b16 %v1098
    %v1192 = vunpack.c.h.b16 %v1098
    %v1193 = vunpack.c.l.b16 %v1099
    %v1194 = vunpack.c.h.b16 %v1099
    %v1195 = vunpack.c.l.b16 %v1100
    %v1196 = vunpack.c.h.b16 %v1100
    %v1197 = vunpack.c.l.b16 %v1101
    %v1198 = vunpack.c.h.b16 %v1101
    %v1199 = vunpack.c.l.b16 %v1102
    %v1200 = vunpack.c.h.b16 %v1102
    %v1201 = vunpack.c.l.b16 %v1103
    %v1202 = vunpack.c.h.b16 %v1103
    %v1203 = vunpack.c.l.b16 %v1104
    %v1204 = vunpack.c.h.b16 %v1104
    %v1205 = vunpack.c.l.b16 %v1105
    %v1206 = vunpack.c.h.b16 %v1105
    %v1207 = vunpack.c.l.b16 %v1106
    %v1208 = vunpack.c.h.b16 %v1106
    %v1209 = vunpack.c.l.b16 %v1107
    %v1210 = vunpack.c.h.b16 %v1107
    %v1211 = vunpack.c.l.b16 %v1108
    %v1212 = vunpack.c.h.b16 %v1108
    %v1213 = vunpack.c.l.b16 %v1109
    %v1214 = vunpack.c.h.b16 %v1109
    %v1215 = vunpack.c.l.b16 %v1110
    %v1216 = vunpack.c.h.b16 %v1110
    %v1217 = vunpack.c.l.b16 %v1111
    %v1218 = vunpack.c.h.b16 %v1111
    %v1219 = vunpack.c.l.b16 %v1112
    %v1220 = vunpack.c.h.b16 %v1112
    %v1221 = vpack.c.b16 %v1159, %v1157
    %v1222 = vpack.c.b16 %v1160, %v1158
    %v1223 = vpack.c.b16 %v1163, %v1161
    %v1224 = vpack.c.b16 %v1164, %v1162
    %v1225 = vpack.c.b16 %v1167, %v1165
    %v1226 = vpack.c.b16 %v1168, %v1166
    %v1227 = vpack.c.b16 %v1171, %v1169
    %v1228 = vpack.c.b16 %v1172, %v1170
    %v1229 = vpack.c.b16 %v1175, %v1173
    %v1230 = vpack.c.b16 %v1176, %v1174
    %v1231 = vpack.c.b16 %v1179, %v1177
    %v1232 = vpack.c.b16 %v1180, %v1178
    %v1233 = vpack.c.b16 %v1183, %v1181
    %v1234 = vpack.c.b16 %v1184, %v1182
    %v1235 = vpack.c.b16 %v1187, %v1185
    %v1236 = vpack.c.b16 %v1188, %v1186
    %v1237 = vpack.c.b16 %v1191, %v1189
    %v1238 = vpack.c.b16 %v1192, %v1190
    %v1239 = vpack.c.b16 %v1195, %v1193
    %v1240 = vpack.c.b16 %v1196, %v1194
    %v1241 = vpack.c.b16 %v1199, %v1197
    %v1242 = vpack.c.b16 %v1200, %v1198
    %v1243 = vpack.c.b16 %v1203, %v1201
    %v1244 = vpack.c.b16 %v1204, %v1202
    %v1245 = vpack.c.b16 %v1207, %v1205
    %v1246 = vpack.c.b16 %v1208, %v1206
    %v1247 = vpack.c.b16 %v1211, %v1209
    %v1248 = vpack.c.b16 %v1212, %v1210
    %v1249 = vpack.c.b16 %v1215, %v1213
    %v1250 = vpack.c.b16 %v1216, %v1214
    %v1251 = vpack.c.b16 %v1219, %v1217
    %v1252 = vpack.c.b16 %v1220, %v1218
    %1285 = vmatprep.subr.bf16.mxu0 %v1222
    %1286 = vmatpush1.bf16.msra.mxu0 %v1221
    %1287 = vmatprep.subr.bf16.mxu0 %v1224
    %1288 = vmatpush1.bf16.msra.mxu0 %v1223
    %1289 = vmatprep.subr.bf16.mxu0 %v1226
    %1290 = vmatpush1.bf16.msra.mxu0 %v1225
    %1291 = vmatprep.subr.bf16.mxu0 %v1228
    %1292 = vmatpush1.bf16.msra.mxu0 %v1227
    %1293 = vmatprep.subr.bf16.mxu0 %v1230
    %1294 = vmatpush1.bf16.msra.mxu0 %v1229
    %1295 = vmatprep.subr.bf16.mxu0 %v1232
    %1296 = vmatpush1.bf16.msra.mxu0 %v1231
    %1297 = vmatprep.subr.bf16.mxu0 %v1234
    %1298 = vmatpush1.bf16.msra.mxu0 %v1233
    %1299 = vmatprep.subr.bf16.mxu0 %v1236
    %1300 = vmatpush1.bf16.msra.mxu0 %v1235
    %1301 = vmatprep.subr.bf16.mxu0 %v1238
    %1302 = vmatpush1.bf16.msra.mxu0 %v1237
    %1303 = vmatprep.subr.bf16.mxu0 %v1240
    %1304 = vmatpush1.bf16.msra.mxu0 %v1239
    %1305 = vmatprep.subr.bf16.mxu0 %v1242
    %1306 = vmatpush1.bf16.msra.mxu0 %v1241
    %1307 = vmatprep.subr.bf16.mxu0 %v1244
    %1308 = vmatpush1.bf16.msra.mxu0 %v1243
    %1309 = vmatprep.subr.bf16.mxu0 %v1246
    %1310 = vmatpush1.bf16.msra.mxu0 %v1245
    %1311 = vmatprep.subr.bf16.mxu0 %v1248
    %1312 = vmatpush1.bf16.msra.mxu0 %v1247
    %1313 = vmatprep.subr.bf16.mxu0 %v1250
    %1314 = vmatpush1.bf16.msra.mxu0 %v1249
    %1315 = vmatprep.subr.bf16.mxu0 %v1252
    %1316 = vmatpush1.bf16.msra.mxu0 %v1251
    %1317 = vmatprep.mubr.bf16.mxu0 %v1080
    %1318 = vmatmul.mubr.bf16.gmra.mrb[0].mxu0 %v1079
    %v1319 = vpop.f32.mrb[0].mxu0
    %v1320 = vadd.f32 %v1118, %v1319
    %v1321 = vpop.f32.mrb[0].mxu0
    %v1322 = vadd.f32 %v1122, %v1321
    %v1323 = vpop.f32.mrb[0].mxu0
    %v1324 = vpop.f32.mrb[0].mxu0
    %1325 = vdwg.mxu0
    %v1328 = vcombine.low %v1320, %v1322
    %v1330 = vunpack.c.l.s4 1983009808
    %v1331 = vunpack.c.0.s8 %v1330
    %v1332 = vlaneseq
    %v1333 = vshrl.u32 %v1332, 7
    %v1334 = vsub.s32 %v1331, %v1333
    %v1335 = vrot.slane %v1328, %v1334
    %1337 = vst [vmem:[%s11] sm:$0xf] %v1335
    %v1338 = vmul.f32 %v1322, 0.5
    %v1339 = vmul.f32 %v1338, 1.442695
    %v1340 = vpow.pop %v1339
    %v1341 = vld [vmem:[%s5] sm:$0x3]
    %v1342 = vmul.f32 %v1340, %v1341
    %v1343 = vadd.f32 %v1320, %v1342
    %v1344 = vpack.c.bf16 %v1343, %v1343
    %v1345 = vld [vmem:[%s6] sm:$0xff]
    %v1346 = vld [vmem:[%s6 + $0x8] sm:$0xff]
    %v1347 = vld [vmem:[%s6 + $0x10] sm:$0xff]
    %v1348 = vld [vmem:[%s6 + $0x18] sm:$0xff]
    %v1349 = vld [vmem:[%s6 + $0x20] sm:$0xff]
    %v1350 = vld [vmem:[%s6 + $0x28] sm:$0xff]
    %v1351 = vld [vmem:[%s6 + $0x30] sm:$0xff]
    %v1352 = vld [vmem:[%s6 + $0x38] sm:$0xff]
    %v1353 = vld [vmem:[%s6 + $0x40] sm:$0xff]
    %v1354 = vld [vmem:[%s6 + $0x48] sm:$0xff]
    %v1355 = vld [vmem:[%s6 + $0x50] sm:$0xff]
    %v1356 = vld [vmem:[%s6 + $0x58] sm:$0xff]
    %v1357 = vld [vmem:[%s6 + $0x60] sm:$0xff]
    %v1358 = vld [vmem:[%s6 + $0x68] sm:$0xff]
    %v1359 = vld [vmem:[%s6 + $0x70] sm:$0xff]
    %v1360 = vld [vmem:[%s6 + $0x78] sm:$0xff]
    %v1361 = vld [vmem:[%s7] sm:$0x3]
    %v1363 = vlaneseq
    %v1364 = vshrl.u32 %v1363, 7
    %v1365 = vsub.s32 0, %v1364
    %v1366 = vrot.slane %v1361, %v1365
    %v1367 = vlaneseq
    %v1368 = vshrl.u32 %v1367, 7
    %v1369 = vsub.s32 1, %v1368
    %v1370 = vrot.slane %v1361, %v1369
    %v1389 = vunpack.c.l.b16 %v1345
    %v1390 = vunpack.c.h.b16 %v1345
    %v1391 = vunpack.c.l.b16 %v1346
    %v1392 = vunpack.c.h.b16 %v1346
    %v1393 = vunpack.c.l.b16 %v1347
    %v1394 = vunpack.c.h.b16 %v1347
    %v1395 = vunpack.c.l.b16 %v1348
    %v1396 = vunpack.c.h.b16 %v1348
    %v1397 = vunpack.c.l.b16 %v1349
    %v1398 = vunpack.c.h.b16 %v1349
    %v1399 = vunpack.c.l.b16 %v1350
    %v1400 = vunpack.c.h.b16 %v1350
    %v1401 = vunpack.c.l.b16 %v1351
    %v1402 = vunpack.c.h.b16 %v1351
    %v1403 = vunpack.c.l.b16 %v1352
    %v1404 = vunpack.c.h.b16 %v1352
    %v1405 = vunpack.c.l.b16 %v1353
    %v1406 = vunpack.c.h.b16 %v1353
    %v1407 = vunpack.c.l.b16 %v1354
    %v1408 = vunpack.c.h.b16 %v1354
    %v1409 = vunpack.c.l.b16 %v1355
    %v1410 = vunpack.c.h.b16 %v1355
    %v1411 = vunpack.c.l.b16 %v1356
    %v1412 = vunpack.c.h.b16 %v1356
    %v1413 = vunpack.c.l.b16 %v1357
    %v1414 = vunpack.c.h.b16 %v1357
    %v1415 = vunpack.c.l.b16 %v1358
    %v1416 = vunpack.c.h.b16 %v1358
    %v1417 = vunpack.c.l.b16 %v1359
    %v1418 = vunpack.c.h.b16 %v1359
    %v1419 = vunpack.c.l.b16 %v1360
    %v1420 = vunpack.c.h.b16 %v1360
    %v1421 = vpack.c.b16 %v1391, %v1389
    %v1422 = vpack.c.b16 %v1392, %v1390
    %v1423 = vpack.c.b16 %v1395, %v1393
    %v1424 = vpack.c.b16 %v1396, %v1394
    %v1425 = vpack.c.b16 %v1399, %v1397
    %v1426 = vpack.c.b16 %v1400, %v1398
    %v1427 = vpack.c.b16 %v1403, %v1401
    %v1428 = vpack.c.b16 %v1404, %v1402
    %v1429 = vpack.c.b16 %v1407, %v1405
    %v1430 = vpack.c.b16 %v1408, %v1406
    %v1431 = vpack.c.b16 %v1411, %v1409
    %v1432 = vpack.c.b16 %v1412, %v1410
    %v1433 = vpack.c.b16 %v1415, %v1413
    %v1434 = vpack.c.b16 %v1416, %v1414
    %v1435 = vpack.c.b16 %v1419, %v1417
    %v1436 = vpack.c.b16 %v1420, %v1418
    %1453 = vmatprep.subr.bf16.mxu0 %v1422
    %1454 = vmatpush1.bf16.msra.mxu0 %v1421
    %1455 = vmatprep.subr.bf16.mxu0 %v1424
    %1456 = vmatpush1.bf16.msra.mxu0 %v1423
    %1457 = vmatprep.subr.bf16.mxu0 %v1426
    %1458 = vmatpush1.bf16.msra.mxu0 %v1425
    %1459 = vmatprep.subr.bf16.mxu0 %v1428
    %1460 = vmatpush1.bf16.msra.mxu0 %v1427
    %1461 = vmatprep.subr.bf16.mxu0 %v1430
    %1462 = vmatpush1.bf16.msra.mxu0 %v1429
    %1463 = vmatprep.subr.bf16.mxu0 %v1432
    %1464 = vmatpush1.bf16.msra.mxu0 %v1431
    %1465 = vmatprep.subr.bf16.mxu0 %v1434
    %1466 = vmatpush1.bf16.msra.mxu0 %v1433
    %1467 = vmatprep.subr.bf16.mxu0 %v1436
    %1468 = vmatpush1.bf16.msra.mxu0 %v1435
    %1469 = vmatprep.subr.bf16.mxu0 0
    %1470 = vmatpush1.bf16.msra.mxu0 0
    %1471 = vmatprep.subr.bf16.mxu0 0
    %1472 = vmatpush1.bf16.msra.mxu0 0
    %1473 = vmatprep.subr.bf16.mxu0 0
    %1474 = vmatpush1.bf16.msra.mxu0 0
    %1475 = vmatprep.subr.bf16.mxu0 0
    %1476 = vmatpush1.bf16.msra.mxu0 0
    %1477 = vmatprep.subr.bf16.mxu0 0
    %1478 = vmatpush1.bf16.msra.mxu0 0
    %1479 = vmatprep.subr.bf16.mxu0 0
    %1480 = vmatpush1.bf16.msra.mxu0 0
    %1481 = vmatprep.subr.bf16.mxu0 0
    %1482 = vmatpush1.bf16.msra.mxu0 0
    %1483 = vmatprep.subr.bf16.mxu0 0
    %1484 = vmatpush1.bf16.msra.mxu0 0
    %1485 = vmatprep.mubr.bf16.mxu0 0
    %1486 = vmatmul.mubr.bf16.gmra.mrb[0].mxu0 %v1344
    %v1487 = vpop.f32.mrb[0].mxu0
    %v1488 = vadd.f32 %v1366, %v1487
    %v1489 = vpop.f32.mrb[0].mxu0
    %v1490 = vadd.f32 %v1370, %v1489
    %v1491 = vpop.f32.mrb[0].mxu0
    %v1492 = vpop.f32.mrb[0].mxu0
    %1493 = vdwg.mxu0
    %v1494 = vmax.f32 %v1488, 0.0
    %v1495 = vmax.f32 %v1490, 0.0
    %v1496 = vpack.c.bf16 %v1494, %v1494
    %v1497 = vpack.c.bf16 %v1495, %v1495
    %v1498 = vld [vmem:[#allocation6] sm:$0xff]
    %v1499 = vld [vmem:[#allocation6 + $0x8] sm:$0xff]
    %v1500 = vld [vmem:[#allocation6 + $0x10] sm:$0xff]
    %v1501 = vld [vmem:[#allocation6 + $0x18] sm:$0xff]
    %v1502 = vld [vmem:[#allocation6 + $0x20] sm:$0xff]
    %v1503 = vld [vmem:[#allocation6 + $0x28] sm:$0xff]
    %v1504 = vld [vmem:[#allocation6 + $0x30] sm:$0xff]
    %v1505 = vld [vmem:[#allocation6 + $0x38] sm:$0xff]
    %v1506 = vld [vmem:[#allocation6 + $0x40] sm:$0xff]
    %v1507 = vld [vmem:[#allocation6 + $0x48] sm:$0xff]
    %v1508 = vld [vmem:[#allocation6 + $0x50] sm:$0xff]
    %v1509 = vld [vmem:[#allocation6 + $0x58] sm:$0xff]
    %v1510 = vld [vmem:[#allocation6 + $0x60] sm:$0xff]
    %v1511 = vld [vmem:[#allocation6 + $0x68] sm:$0xff]
    %v1512 = vld [vmem:[#allocation6 + $0x70] sm:$0xff]
    %v1513 = vld [vmem:[#allocation6 + $0x78] sm:$0xff]
    %v1514 = vld [vmem:[#allocation6 + $0x80] sm:$0xff]
    %v1515 = vld [vmem:[#allocation6 + $0x88] sm:$0xff]
    %v1516 = vld [vmem:[#allocation6 + $0x90] sm:$0xff]
    %v1517 = vld [vmem:[#allocation6 + $0x98] sm:$0xff]
    %v1518 = vld [vmem:[#allocation6 + $0xa0] sm:$0xff]
    %v1519 = vld [vmem:[#allocation6 + $0xa8] sm:$0xff]
    %v1520 = vld [vmem:[#allocation6 + $0xb0] sm:$0xff]
    %v1521 = vld [vmem:[#allocation6 + $0xb8] sm:$0xff]
    %v1522 = vld [vmem:[#allocation6 + $0xc0] sm:$0xff]
    %v1523 = vld [vmem:[#allocation6 + $0xc8] sm:$0xff]
    %v1524 = vld [vmem:[#allocation6 + $0xd0] sm:$0xff]
    %v1525 = vld [vmem:[#allocation6 + $0xd8] sm:$0xff]
    %v1526 = vld [vmem:[#allocation6 + $0xe0] sm:$0xff]
    %v1527 = vld [vmem:[#allocation6 + $0xe8] sm:$0xff]
    %v1528 = vld [vmem:[#allocation6 + $0xf0] sm:$0xff]
    %v1529 = vld [vmem:[#allocation6 + $0xf8] sm:$0xff]
    %v1530 = vld [vmem:[#allocation6 + $0x100] sm:$0xff]
    %v1531 = vld [vmem:[#allocation6 + $0x108] sm:$0xff]
    %v1532 = vld [vmem:[#allocation6 + $0x110] sm:$0xff]
    %v1533 = vld [vmem:[#allocation6 + $0x118] sm:$0xff]
    %v1534 = vld [vmem:[#allocation6 + $0x120] sm:$0xff]
    %v1535 = vld [vmem:[#allocation6 + $0x128] sm:$0xff]
    %v1536 = vld [vmem:[#allocation6 + $0x130] sm:$0xff]
    %v1537 = vld [vmem:[#allocation6 + $0x138] sm:$0xff]
    %v1538 = vld [vmem:[#allocation6 + $0x140] sm:$0xff]
    %v1539 = vld [vmem:[#allocation6 + $0x148] sm:$0xff]
    %v1540 = vld [vmem:[#allocation6 + $0x150] sm:$0xff]
    %v1541 = vld [vmem:[#allocation6 + $0x158] sm:$0xff]
    %v1542 = vld [vmem:[#allocation6 + $0x160] sm:$0xff]
    %v1543 = vld [vmem:[#allocation6 + $0x168] sm:$0xff]
    %v1544 = vld [vmem:[#allocation6 + $0x170] sm:$0xff]
    %v1545 = vld [vmem:[#allocation6 + $0x178] sm:$0xff]
    %v1546 = vld [vmem:[#allocation6 + $0x180] sm:$0xff]
    %v1547 = vld [vmem:[#allocation6 + $0x188] sm:$0xff]
    %v1548 = vld [vmem:[#allocation6 + $0x190] sm:$0xff]
    %v1549 = vld [vmem:[#allocation6 + $0x198] sm:$0xff]
    %v1550 = vld [vmem:[#allocation6 + $0x1a0] sm:$0xff]
    %v1551 = vld [vmem:[#allocation6 + $0x1a8] sm:$0xff]
    %v1552 = vld [vmem:[#allocation6 + $0x1b0] sm:$0xff]
    %v1553 = vld [vmem:[#allocation6 + $0x1b8] sm:$0xff]
    %v1554 = vld [vmem:[#allocation6 + $0x1c0] sm:$0xff]
    %v1555 = vld [vmem:[#allocation6 + $0x1c8] sm:$0xff]
    %v1556 = vld [vmem:[#allocation6 + $0x1d0] sm:$0xff]
    %v1557 = vld [vmem:[#allocation6 + $0x1d8] sm:$0xff]
    %v1558 = vld [vmem:[#allocation6 + $0x1e0] sm:$0xff]
    %v1559 = vld [vmem:[#allocation6 + $0x1e8] sm:$0xff]
    %v1560 = vld [vmem:[#allocation6 + $0x1f0] sm:$0xff]
    %v1561 = vld [vmem:[#allocation6 + $0x1f8] sm:$0xff]
    %v1562 = vld [vmem:[#allocation6 + $0x200] sm:$0xff]
    %v1563 = vld [vmem:[#allocation6 + $0x208] sm:$0xff]
    %v1564 = vld [vmem:[#allocation6 + $0x210] sm:$0xff]
    %v1565 = vld [vmem:[#allocation6 + $0x218] sm:$0xff]
    %v1566 = vld [vmem:[#allocation6 + $0x220] sm:$0xff]
    %v1567 = vld [vmem:[#allocation6 + $0x228] sm:$0xff]
    %v1568 = vld [vmem:[#allocation6 + $0x230] sm:$0xff]
    %v1569 = vld [vmem:[#allocation6 + $0x238] sm:$0xff]
    %v1570 = vld [vmem:[#allocation6 + $0x240] sm:$0xff]
    %v1571 = vld [vmem:[#allocation6 + $0x248] sm:$0xff]
    %v1572 = vld [vmem:[#allocation6 + $0x250] sm:$0xff]
    %v1573 = vld [vmem:[#allocation6 + $0x258] sm:$0xff]
    %v1574 = vld [vmem:[#allocation6 + $0x260] sm:$0xff]
    %v1575 = vld [vmem:[#allocation6 + $0x268] sm:$0xff]
    %v1576 = vld [vmem:[#allocation6 + $0x270] sm:$0xff]
    %v1577 = vld [vmem:[#allocation6 + $0x278] sm:$0xff]
    %v1578 = vld [vmem:[#allocation6 + $0x280] sm:$0xff]
    %v1579 = vld [vmem:[#allocation6 + $0x288] sm:$0xff]
    %v1580 = vld [vmem:[#allocation6 + $0x290] sm:$0xff]
    %v1581 = vld [vmem:[#allocation6 + $0x298] sm:$0xff]
    %v1582 = vld [vmem:[#allocation6 + $0x2a0] sm:$0xff]
    %v1583 = vld [vmem:[#allocation6 + $0x2a8] sm:$0xff]
    %v1584 = vld [vmem:[#allocation6 + $0x2b0] sm:$0xff]
    %v1585 = vld [vmem:[#allocation6 + $0x2b8] sm:$0xff]
    %v1586 = vld [vmem:[#allocation6 + $0x2c0] sm:$0xff]
    %v1587 = vld [vmem:[#allocation6 + $0x2c8] sm:$0xff]
    %v1588 = vld [vmem:[#allocation6 + $0x2d0] sm:$0xff]
    %v1589 = vld [vmem:[#allocation6 + $0x2d8] sm:$0xff]
    %v1590 = vld [vmem:[#allocation6 + $0x2e0] sm:$0xff]
    %v1591 = vld [vmem:[#allocation6 + $0x2e8] sm:$0xff]
    %v1592 = vld [vmem:[#allocation6 + $0x2f0] sm:$0xff]
    %v1593 = vld [vmem:[#allocation6 + $0x2f8] sm:$0xff]
    %v1594 = vld [vmem:[#allocation6 + $0x300] sm:$0xff]
    %v1595 = vld [vmem:[#allocation6 + $0x308] sm:$0xff]
    %v1596 = vld [vmem:[#allocation6 + $0x310] sm:$0xff]
    %v1597 = vld [vmem:[#allocation6 + $0x318] sm:$0xff]
    %v1598 = vld [vmem:[#allocation6 + $0x320] sm:$0xff]
    %v1599 = vld [vmem:[#allocation6 + $0x328] sm:$0xff]
    %v1600 = vld [vmem:[#allocation6 + $0x330] sm:$0xff]
    %v1601 = vld [vmem:[#allocation6 + $0x338] sm:$0xff]
    %v1602 = vld [vmem:[#allocation6 + $0x340] sm:$0xff]
    %v1603 = vld [vmem:[#allocation6 + $0x348] sm:$0xff]
    %v1604 = vld [vmem:[#allocation6 + $0x350] sm:$0xff]
    %v1605 = vld [vmem:[#allocation6 + $0x358] sm:$0xff]
    %v1606 = vld [vmem:[#allocation6 + $0x360] sm:$0xff]
    %v1607 = vld [vmem:[#allocation6 + $0x368] sm:$0xff]
    %v1608 = vld [vmem:[#allocation6 + $0x370] sm:$0xff]
    %v1609 = vld [vmem:[#allocation6 + $0x378] sm:$0xff]
    %v1610 = vld [vmem:[#allocation6 + $0x380] sm:$0xff]
    %v1611 = vld [vmem:[#allocation6 + $0x388] sm:$0xff]
    %v1612 = vld [vmem:[#allocation6 + $0x390] sm:$0xff]
    %v1613 = vld [vmem:[#allocation6 + $0x398] sm:$0xff]
    %v1614 = vld [vmem:[#allocation6 + $0x3a0] sm:$0xff]
    %v1615 = vld [vmem:[#allocation6 + $0x3a8] sm:$0xff]
    %v1616 = vld [vmem:[#allocation6 + $0x3b0] sm:$0xff]
    %v1617 = vld [vmem:[#allocation6 + $0x3b8] sm:$0xff]
    %v1618 = vld [vmem:[#allocation6 + $0x3c0] sm:$0xff]
    %v1619 = vld [vmem:[#allocation6 + $0x3c8] sm:$0xff]
    %v1620 = vld [vmem:[#allocation6 + $0x3d0] sm:$0xff]
    %v1621 = vld [vmem:[#allocation6 + $0x3d8] sm:$0xff]
    %v1622 = vld [vmem:[#allocation6 + $0x3e0] sm:$0xff]
    %v1623 = vld [vmem:[#allocation6 + $0x3e8] sm:$0xff]
    %v1624 = vld [vmem:[#allocation6 + $0x3f0] sm:$0xff]
    %v1625 = vld [vmem:[#allocation6 + $0x3f8] sm:$0xff]
    %v1626 = vld [vmem:[%s9] sm:$0xff]
    %v1628 = vlaneseq
    %v1629 = vshrl.u32 %v1628, 7
    %v1630 = vsub.s32 0, %v1629
    %v1631 = vrot.slane %v1626, %v1630
    %v1632 = vlaneseq
    %v1633 = vshrl.u32 %v1632, 7
    %v1634 = vsub.s32 1, %v1633
    %v1635 = vrot.slane %v1626, %v1634
    %v1636 = vlaneseq
    %v1637 = vshrl.u32 %v1636, 7
    %v1638 = vsub.s32 2, %v1637
    %v1639 = vrot.slane %v1626, %v1638
    %v1640 = vlaneseq
    %v1641 = vshrl.u32 %v1640, 7
    %v1642 = vsub.s32 3, %v1641
    %v1643 = vrot.slane %v1626, %v1642
    %v1644 = vlaneseq
    %v1645 = vshrl.u32 %v1644, 7
    %v1646 = vsub.s32 4, %v1645
    %v1647 = vrot.slane %v1626, %v1646
    %v1648 = vlaneseq
    %v1649 = vshrl.u32 %v1648, 7
    %v1650 = vsub.s32 5, %v1649
    %v1651 = vrot.slane %v1626, %v1650
    %v1652 = vlaneseq
    %v1653 = vshrl.u32 %v1652, 7
    %v1654 = vsub.s32 6, %v1653
    %v1655 = vrot.slane %v1626, %v1654
    %v1656 = vlaneseq
    %v1657 = vshrl.u32 %v1656, 7
    %v1658 = vsub.s32 7, %v1657
    %v1659 = vrot.slane %v1626, %v1658
    %v1796 = vunpack.c.l.b16 %v1498
    %v1797 = vunpack.c.h.b16 %v1498
    %v1798 = vunpack.c.l.b16 %v1499
    %v1799 = vunpack.c.h.b16 %v1499
    %v1800 = vunpack.c.l.b16 %v1500
    %v1801 = vunpack.c.h.b16 %v1500
    %v1802 = vunpack.c.l.b16 %v1501
    %v1803 = vunpack.c.h.b16 %v1501
    %v1804 = vunpack.c.l.b16 %v1502
    %v1805 = vunpack.c.h.b16 %v1502
    %v1806 = vunpack.c.l.b16 %v1503
    %v1807 = vunpack.c.h.b16 %v1503
    %v1808 = vunpack.c.l.b16 %v1504
    %v1809 = vunpack.c.h.b16 %v1504
    %v1810 = vunpack.c.l.b16 %v1505
    %v1811 = vunpack.c.h.b16 %v1505
    %v1812 = vunpack.c.l.b16 %v1506
    %v1813 = vunpack.c.h.b16 %v1506
    %v1814 = vunpack.c.l.b16 %v1507
    %v1815 = vunpack.c.h.b16 %v1507
    %v1816 = vunpack.c.l.b16 %v1508
    %v1817 = vunpack.c.h.b16 %v1508
    %v1818 = vunpack.c.l.b16 %v1509
    %v1819 = vunpack.c.h.b16 %v1509
    %v1820 = vunpack.c.l.b16 %v1510
    %v1821 = vunpack.c.h.b16 %v1510
    %v1822 = vunpack.c.l.b16 %v1511
    %v1823 = vunpack.c.h.b16 %v1511
    %v1824 = vunpack.c.l.b16 %v1512
    %v1825 = vunpack.c.h.b16 %v1512
    %v1826 = vunpack.c.l.b16 %v1513
    %v1827 = vunpack.c.h.b16 %v1513
    %v1828 = vunpack.c.l.b16 %v1514
    %v1829 = vunpack.c.h.b16 %v1514
    %v1830 = vunpack.c.l.b16 %v1515
    %v1831 = vunpack.c.h.b16 %v1515
    %v1832 = vunpack.c.l.b16 %v1516
    %v1833 = vunpack.c.h.b16 %v1516
    %v1834 = vunpack.c.l.b16 %v1517
    %v1835 = vunpack.c.h.b16 %v1517
    %v1836 = vunpack.c.l.b16 %v1518
    %v1837 = vunpack.c.h.b16 %v1518
    %v1838 = vunpack.c.l.b16 %v1519
    %v1839 = vunpack.c.h.b16 %v1519
    %v1840 = vunpack.c.l.b16 %v1520
    %v1841 = vunpack.c.h.b16 %v1520
    %v1842 = vunpack.c.l.b16 %v1521
    %v1843 = vunpack.c.h.b16 %v1521
    %v1844 = vunpack.c.l.b16 %v1522
    %v1845 = vunpack.c.h.b16 %v1522
    %v1846 = vunpack.c.l.b16 %v1523
    %v1847 = vunpack.c.h.b16 %v1523
    %v1848 = vunpack.c.l.b16 %v1524
    %v1849 = vunpack.c.h.b16 %v1524
    %v1850 = vunpack.c.l.b16 %v1525
    %v1851 = vunpack.c.h.b16 %v1525
    %v1852 = vunpack.c.l.b16 %v1526
    %v1853 = vunpack.c.h.b16 %v1526
    %v1854 = vunpack.c.l.b16 %v1527
    %v1855 = vunpack.c.h.b16 %v1527
    %v1856 = vunpack.c.l.b16 %v1528
    %v1857 = vunpack.c.h.b16 %v1528
    %v1858 = vunpack.c.l.b16 %v1529
    %v1859 = vunpack.c.h.b16 %v1529
    %v1860 = vunpack.c.l.b16 %v1530
    %v1861 = vunpack.c.h.b16 %v1530
    %v1862 = vunpack.c.l.b16 %v1531
    %v1863 = vunpack.c.h.b16 %v1531
    %v1864 = vunpack.c.l.b16 %v1532
    %v1865 = vunpack.c.h.b16 %v1532
    %v1866 = vunpack.c.l.b16 %v1533
    %v1867 = vunpack.c.h.b16 %v1533
    %v1868 = vunpack.c.l.b16 %v1534
    %v1869 = vunpack.c.h.b16 %v1534
    %v1870 = vunpack.c.l.b16 %v1535
    %v1871 = vunpack.c.h.b16 %v1535
    %v1872 = vunpack.c.l.b16 %v1536
    %v1873 = vunpack.c.h.b16 %v1536
    %v1874 = vunpack.c.l.b16 %v1537
    %v1875 = vunpack.c.h.b16 %v1537
    %v1876 = vunpack.c.l.b16 %v1538
    %v1877 = vunpack.c.h.b16 %v1538
    %v1878 = vunpack.c.l.b16 %v1539
    %v1879 = vunpack.c.h.b16 %v1539
    %v1880 = vunpack.c.l.b16 %v1540
    %v1881 = vunpack.c.h.b16 %v1540
    %v1882 = vunpack.c.l.b16 %v1541
    %v1883 = vunpack.c.h.b16 %v1541
    %v1884 = vunpack.c.l.b16 %v1542
    %v1885 = vunpack.c.h.b16 %v1542
    %v1886 = vunpack.c.l.b16 %v1543
    %v1887 = vunpack.c.h.b16 %v1543
    %v1888 = vunpack.c.l.b16 %v1544
    %v1889 = vunpack.c.h.b16 %v1544
    %v1890 = vunpack.c.l.b16 %v1545
    %v1891 = vunpack.c.h.b16 %v1545
    %v1892 = vunpack.c.l.b16 %v1546
    %v1893 = vunpack.c.h.b16 %v1546
    %v1894 = vunpack.c.l.b16 %v1547
    %v1895 = vunpack.c.h.b16 %v1547
    %v1896 = vunpack.c.l.b16 %v1548
    %v1897 = vunpack.c.h.b16 %v1548
    %v1898 = vunpack.c.l.b16 %v1549
    %v1899 = vunpack.c.h.b16 %v1549
    %v1900 = vunpack.c.l.b16 %v1550
    %v1901 = vunpack.c.h.b16 %v1550
    %v1902 = vunpack.c.l.b16 %v1551
    %v1903 = vunpack.c.h.b16 %v1551
    %v1904 = vunpack.c.l.b16 %v1552
    %v1905 = vunpack.c.h.b16 %v1552
    %v1906 = vunpack.c.l.b16 %v1553
    %v1907 = vunpack.c.h.b16 %v1553
    %v1908 = vunpack.c.l.b16 %v1554
    %v1909 = vunpack.c.h.b16 %v1554
    %v1910 = vunpack.c.l.b16 %v1555
    %v1911 = vunpack.c.h.b16 %v1555
    %v1912 = vunpack.c.l.b16 %v1556
    %v1913 = vunpack.c.h.b16 %v1556
    %v1914 = vunpack.c.l.b16 %v1557
    %v1915 = vunpack.c.h.b16 %v1557
    %v1916 = vunpack.c.l.b16 %v1558
    %v1917 = vunpack.c.h.b16 %v1558
    %v1918 = vunpack.c.l.b16 %v1559
    %v1919 = vunpack.c.h.b16 %v1559
    %v1920 = vunpack.c.l.b16 %v1560
    %v1921 = vunpack.c.h.b16 %v1560
    %v1922 = vunpack.c.l.b16 %v1561
    %v1923 = vunpack.c.h.b16 %v1561
    %v1924 = vunpack.c.l.b16 %v1562
    %v1925 = vunpack.c.h.b16 %v1562
    %v1926 = vunpack.c.l.b16 %v1563
    %v1927 = vunpack.c.h.b16 %v1563
    %v1928 = vunpack.c.l.b16 %v1564
    %v1929 = vunpack.c.h.b16 %v1564
    %v1930 = vunpack.c.l.b16 %v1565
    %v1931 = vunpack.c.h.b16 %v1565
    %v1932 = vunpack.c.l.b16 %v1566
    %v1933 = vunpack.c.h.b16 %v1566
    %v1934 = vunpack.c.l.b16 %v1567
    %v1935 = vunpack.c.h.b16 %v1567
    %v1936 = vunpack.c.l.b16 %v1568
    %v1937 = vunpack.c.h.b16 %v1568
    %v1938 = vunpack.c.l.b16 %v1569
    %v1939 = vunpack.c.h.b16 %v1569
    %v1940 = vunpack.c.l.b16 %v1570
    %v1941 = vunpack.c.h.b16 %v1570
    %v1942 = vunpack.c.l.b16 %v1571
    %v1943 = vunpack.c.h.b16 %v1571
    %v1944 = vunpack.c.l.b16 %v1572
    %v1945 = vunpack.c.h.b16 %v1572
    %v1946 = vunpack.c.l.b16 %v1573
    %v1947 = vunpack.c.h.b16 %v1573
    %v1948 = vunpack.c.l.b16 %v1574
    %v1949 = vunpack.c.h.b16 %v1574
    %v1950 = vunpack.c.l.b16 %v1575
    %v1951 = vunpack.c.h.b16 %v1575
    %v1952 = vunpack.c.l.b16 %v1576
    %v1953 = vunpack.c.h.b16 %v1576
    %v1954 = vunpack.c.l.b16 %v1577
    %v1955 = vunpack.c.h.b16 %v1577
    %v1956 = vunpack.c.l.b16 %v1578
    %v1957 = vunpack.c.h.b16 %v1578
    %v1958 = vunpack.c.l.b16 %v1579
    %v1959 = vunpack.c.h.b16 %v1579
    %v1960 = vunpack.c.l.b16 %v1580
    %v1961 = vunpack.c.h.b16 %v1580
    %v1962 = vunpack.c.l.b16 %v1581
    %v1963 = vunpack.c.h.b16 %v1581
    %v1964 = vunpack.c.l.b16 %v1582
    %v1965 = vunpack.c.h.b16 %v1582
    %v1966 = vunpack.c.l.b16 %v1583
    %v1967 = vunpack.c.h.b16 %v1583
    %v1968 = vunpack.c.l.b16 %v1584
    %v1969 = vunpack.c.h.b16 %v1584
    %v1970 = vunpack.c.l.b16 %v1585
    %v1971 = vunpack.c.h.b16 %v1585
    %v1972 = vunpack.c.l.b16 %v1586
    %v1973 = vunpack.c.h.b16 %v1586
    %v1974 = vunpack.c.l.b16 %v1587
    %v1975 = vunpack.c.h.b16 %v1587
    %v1976 = vunpack.c.l.b16 %v1588
    %v1977 = vunpack.c.h.b16 %v1588
    %v1978 = vunpack.c.l.b16 %v1589
    %v1979 = vunpack.c.h.b16 %v1589
    %v1980 = vunpack.c.l.b16 %v1590
    %v1981 = vunpack.c.h.b16 %v1590
    %v1982 = vunpack.c.l.b16 %v1591
    %v1983 = vunpack.c.h.b16 %v1591
    %v1984 = vunpack.c.l.b16 %v1592
    %v1985 = vunpack.c.h.b16 %v1592
    %v1986 = vunpack.c.l.b16 %v1593
    %v1987 = vunpack.c.h.b16 %v1593
    %v1988 = vunpack.c.l.b16 %v1594
    %v1989 = vunpack.c.h.b16 %v1594
    %v1990 = vunpack.c.l.b16 %v1595
    %v1991 = vunpack.c.h.b16 %v1595
    %v1992 = vunpack.c.l.b16 %v1596
    %v1993 = vunpack.c.h.b16 %v1596
    %v1994 = vunpack.c.l.b16 %v1597
    %v1995 = vunpack.c.h.b16 %v1597
    %v1996 = vunpack.c.l.b16 %v1598
    %v1997 = vunpack.c.h.b16 %v1598
    %v1998 = vunpack.c.l.b16 %v1599
    %v1999 = vunpack.c.h.b16 %v1599
    %v2000 = vunpack.c.l.b16 %v1600
    %v2001 = vunpack.c.h.b16 %v1600
    %v2002 = vunpack.c.l.b16 %v1601
    %v2003 = vunpack.c.h.b16 %v1601
    %v2004 = vunpack.c.l.b16 %v1602
    %v2005 = vunpack.c.h.b16 %v1602
    %v2006 = vunpack.c.l.b16 %v1603
    %v2007 = vunpack.c.h.b16 %v1603
    %v2008 = vunpack.c.l.b16 %v1604
    %v2009 = vunpack.c.h.b16 %v1604
    %v2010 = vunpack.c.l.b16 %v1605
    %v2011 = vunpack.c.h.b16 %v1605
    %v2012 = vunpack.c.l.b16 %v1606
    %v2013 = vunpack.c.h.b16 %v1606
    %v2014 = vunpack.c.l.b16 %v1607
    %v2015 = vunpack.c.h.b16 %v1607
    %v2016 = vunpack.c.l.b16 %v1608
    %v2017 = vunpack.c.h.b16 %v1608
    %v2018 = vunpack.c.l.b16 %v1609
    %v2019 = vunpack.c.h.b16 %v1609
    %v2020 = vunpack.c.l.b16 %v1610
    %v2021 = vunpack.c.h.b16 %v1610
    %v2022 = vunpack.c.l.b16 %v1611
    %v2023 = vunpack.c.h.b16 %v1611
    %v2024 = vunpack.c.l.b16 %v1612
    %v2025 = vunpack.c.h.b16 %v1612
    %v2026 = vunpack.c.l.b16 %v1613
    %v2027 = vunpack.c.h.b16 %v1613
    %v2028 = vunpack.c.l.b16 %v1614
    %v2029 = vunpack.c.h.b16 %v1614
    %v2030 = vunpack.c.l.b16 %v1615
    %v2031 = vunpack.c.h.b16 %v1615
    %v2032 = vunpack.c.l.b16 %v1616
    %v2033 = vunpack.c.h.b16 %v1616
    %v2034 = vunpack.c.l.b16 %v1617
    %v2035 = vunpack.c.h.b16 %v1617
    %v2036 = vunpack.c.l.b16 %v1618
    %v2037 = vunpack.c.h.b16 %v1618
    %v2038 = vunpack.c.l.b16 %v1619
    %v2039 = vunpack.c.h.b16 %v1619
    %v2040 = vunpack.c.l.b16 %v1620
    %v2041 = vunpack.c.h.b16 %v1620
    %v2042 = vunpack.c.l.b16 %v1621
    %v2043 = vunpack.c.h.b16 %v1621
    %v2044 = vunpack.c.l.b16 %v1622
    %v2045 = vunpack.c.h.b16 %v1622
    %v2046 = vunpack.c.l.b16 %v1623
    %v2047 = vunpack.c.h.b16 %v1623
    %v2048 = vunpack.c.l.b16 %v1624
    %v2049 = vunpack.c.h.b16 %v1624
    %v2050 = vunpack.c.l.b16 %v1625
    %v2051 = vunpack.c.h.b16 %v1625
    %v2052 = vpack.c.b16 %v1804, %v1796
    %v2053 = vpack.c.b16 %v1805, %v1797
    %v2054 = vpack.c.b16 %v1806, %v1798
    %v2055 = vpack.c.b16 %v1807, %v1799
    %v2056 = vpack.c.b16 %v1808, %v1800
    %v2057 = vpack.c.b16 %v1809, %v1801
    %v2058 = vpack.c.b16 %v1810, %v1802
    %v2059 = vpack.c.b16 %v1811, %v1803
    %v2060 = vpack.c.b16 %v1820, %v1812
    %v2061 = vpack.c.b16 %v1821, %v1813
    %v2062 = vpack.c.b16 %v1822, %v1814
    %v2063 = vpack.c.b16 %v1823, %v1815
    %v2064 = vpack.c.b16 %v1824, %v1816
    %v2065 = vpack.c.b16 %v1825, %v1817
    %v2066 = vpack.c.b16 %v1826, %v1818
    %v2067 = vpack.c.b16 %v1827, %v1819
    %v2068 = vpack.c.b16 %v1836, %v1828
    %v2069 = vpack.c.b16 %v1837, %v1829
    %v2070 = vpack.c.b16 %v1838, %v1830
    %v2071 = vpack.c.b16 %v1839, %v1831
    %v2072 = vpack.c.b16 %v1840, %v1832
    %v2073 = vpack.c.b16 %v1841, %v1833
    %v2074 = vpack.c.b16 %v1842, %v1834
    %v2075 = vpack.c.b16 %v1843, %v1835
    %v2076 = vpack.c.b16 %v1852, %v1844
    %v2077 = vpack.c.b16 %v1853, %v1845
    %v2078 = vpack.c.b16 %v1854, %v1846
    %v2079 = vpack.c.b16 %v1855, %v1847
    %v2080 = vpack.c.b16 %v1856, %v1848
    %v2081 = vpack.c.b16 %v1857, %v1849
    %v2082 = vpack.c.b16 %v1858, %v1850
    %v2083 = vpack.c.b16 %v1859, %v1851
    %v2084 = vpack.c.b16 %v1868, %v1860
    %v2085 = vpack.c.b16 %v1869, %v1861
    %v2086 = vpack.c.b16 %v1870, %v1862
    %v2087 = vpack.c.b16 %v1871, %v1863
    %v2088 = vpack.c.b16 %v1872, %v1864
    %v2089 = vpack.c.b16 %v1873, %v1865
    %v2090 = vpack.c.b16 %v1874, %v1866
    %v2091 = vpack.c.b16 %v1875, %v1867
    %v2092 = vpack.c.b16 %v1884, %v1876
    %v2093 = vpack.c.b16 %v1885, %v1877
    %v2094 = vpack.c.b16 %v1886, %v1878
    %v2095 = vpack.c.b16 %v1887, %v1879
    %v2096 = vpack.c.b16 %v1888, %v1880
    %v2097 = vpack.c.b16 %v1889, %v1881
    %v2098 = vpack.c.b16 %v1890, %v1882
    %v2099 = vpack.c.b16 %v1891, %v1883
    %v2100 = vpack.c.b16 %v1900, %v1892
    %v2101 = vpack.c.b16 %v1901, %v1893
    %v2102 = vpack.c.b16 %v1902, %v1894
    %v2103 = vpack.c.b16 %v1903, %v1895
    %v2104 = vpack.c.b16 %v1904, %v1896
    %v2105 = vpack.c.b16 %v1905, %v1897
    %v2106 = vpack.c.b16 %v1906, %v1898
    %v2107 = vpack.c.b16 %v1907, %v1899
    %v2108 = vpack.c.b16 %v1916, %v1908
    %v2109 = vpack.c.b16 %v1917, %v1909
    %v2110 = vpack.c.b16 %v1918, %v1910
    %v2111 = vpack.c.b16 %v1919, %v1911
    %v2112 = vpack.c.b16 %v1920, %v1912
    %v2113 = vpack.c.b16 %v1921, %v1913
    %v2114 = vpack.c.b16 %v1922, %v1914
    %v2115 = vpack.c.b16 %v1923, %v1915
    %v2116 = vpack.c.b16 %v1932, %v1924
    %v2117 = vpack.c.b16 %v1933, %v1925
    %v2118 = vpack.c.b16 %v1934, %v1926
    %v2119 = vpack.c.b16 %v1935, %v1927
    %v2120 = vpack.c.b16 %v1936, %v1928
    %v2121 = vpack.c.b16 %v1937, %v1929
    %v2122 = vpack.c.b16 %v1938, %v1930
    %v2123 = vpack.c.b16 %v1939, %v1931
    %v2124 = vpack.c.b16 %v1948, %v1940
    %v2125 = vpack.c.b16 %v1949, %v1941
    %v2126 = vpack.c.b16 %v1950, %v1942
    %v2127 = vpack.c.b16 %v1951, %v1943
    %v2128 = vpack.c.b16 %v1952, %v1944
    %v2129 = vpack.c.b16 %v1953, %v1945
    %v2130 = vpack.c.b16 %v1954, %v1946
    %v2131 = vpack.c.b16 %v1955, %v1947
    %v2132 = vpack.c.b16 %v1964, %v1956
    %v2133 = vpack.c.b16 %v1965, %v1957
    %v2134 = vpack.c.b16 %v1966, %v1958
    %v2135 = vpack.c.b16 %v1967, %v1959
    %v2136 = vpack.c.b16 %v1968, %v1960
    %v2137 = vpack.c.b16 %v1969, %v1961
    %v2138 = vpack.c.b16 %v1970, %v1962
    %v2139 = vpack.c.b16 %v1971, %v1963
    %v2140 = vpack.c.b16 %v1980, %v1972
    %v2141 = vpack.c.b16 %v1981, %v1973
    %v2142 = vpack.c.b16 %v1982, %v1974
    %v2143 = vpack.c.b16 %v1983, %v1975
    %v2144 = vpack.c.b16 %v1984, %v1976
    %v2145 = vpack.c.b16 %v1985, %v1977
    %v2146 = vpack.c.b16 %v1986, %v1978
    %v2147 = vpack.c.b16 %v1987, %v1979
    %v2148 = vpack.c.b16 %v1996, %v1988
    %v2149 = vpack.c.b16 %v1997, %v1989
    %v2150 = vpack.c.b16 %v1998, %v1990
    %v2151 = vpack.c.b16 %v1999, %v1991
    %v2152 = vpack.c.b16 %v2000, %v1992
    %v2153 = vpack.c.b16 %v2001, %v1993
    %v2154 = vpack.c.b16 %v2002, %v1994
    %v2155 = vpack.c.b16 %v2003, %v1995
    %v2156 = vpack.c.b16 %v2012, %v2004
    %v2157 = vpack.c.b16 %v2013, %v2005
    %v2158 = vpack.c.b16 %v2014, %v2006
    %v2159 = vpack.c.b16 %v2015, %v2007
    %v2160 = vpack.c.b16 %v2016, %v2008
    %v2161 = vpack.c.b16 %v2017, %v2009
    %v2162 = vpack.c.b16 %v2018, %v2010
    %v2163 = vpack.c.b16 %v2019, %v2011
    %v2164 = vpack.c.b16 %v2028, %v2020
    %v2165 = vpack.c.b16 %v2029, %v2021
    %v2166 = vpack.c.b16 %v2030, %v2022
    %v2167 = vpack.c.b16 %v2031, %v2023
    %v2168 = vpack.c.b16 %v2032, %v2024
    %v2169 = vpack.c.b16 %v2033, %v2025
    %v2170 = vpack.c.b16 %v2034, %v2026
    %v2171 = vpack.c.b16 %v2035, %v2027
    %v2172 = vpack.c.b16 %v2044, %v2036
    %v2173 = vpack.c.b16 %v2045, %v2037
    %v2174 = vpack.c.b16 %v2046, %v2038
    %v2175 = vpack.c.b16 %v2047, %v2039
    %v2176 = vpack.c.b16 %v2048, %v2040
    %v2177 = vpack.c.b16 %v2049, %v2041
    %v2178 = vpack.c.b16 %v2050, %v2042
    %v2179 = vpack.c.b16 %v2051, %v2043
    %2308 = vmatprep.subr.bf16.mxu0 %v2053
    %2309 = vmatpush1.bf16.msra.mxu0 %v2052
    %2310 = vmatprep.subr.bf16.mxu0 %v2061
    %2311 = vmatpush1.bf16.msra.mxu0 %v2060
    %2312 = vmatprep.subr.bf16.mxu0 %v2069
    %2313 = vmatpush1.bf16.msra.mxu0 %v2068
    %2314 = vmatprep.subr.bf16.mxu0 %v2077
    %2315 = vmatpush1.bf16.msra.mxu0 %v2076
    %2316 = vmatprep.subr.bf16.mxu0 %v2085
    %2317 = vmatpush1.bf16.msra.mxu0 %v2084
    %2318 = vmatprep.subr.bf16.mxu0 %v2093
    %2319 = vmatpush1.bf16.msra.mxu0 %v2092
    %2320 = vmatprep.subr.bf16.mxu0 %v2101
    %2321 = vmatpush1.bf16.msra.mxu0 %v2100
    %2322 = vmatprep.subr.bf16.mxu0 %v2109
    %2323 = vmatpush1.bf16.msra.mxu0 %v2108
    %2324 = vmatprep.subr.bf16.mxu0 %v2117
    %2325 = vmatpush1.bf16.msra.mxu0 %v2116
    %2326 = vmatprep.subr.bf16.mxu0 %v2125
    %2327 = vmatpush1.bf16.msra.mxu0 %v2124
    %2328 = vmatprep.subr.bf16.mxu0 %v2133
    %2329 = vmatpush1.bf16.msra.mxu0 %v2132
    %2330 = vmatprep.subr.bf16.mxu0 %v2141
    %2331 = vmatpush1.bf16.msra.mxu0 %v2140
    %2332 = vmatprep.subr.bf16.mxu0 %v2149
    %2333 = vmatpush1.bf16.msra.mxu0 %v2148
    %2334 = vmatprep.subr.bf16.mxu0 %v2157
    %2335 = vmatpush1.bf16.msra.mxu0 %v2156
    %2336 = vmatprep.subr.bf16.mxu0 %v2165
    %2337 = vmatpush1.bf16.msra.mxu0 %v2164
    %2338 = vmatprep.subr.bf16.mxu0 %v2173
    %2339 = vmatpush1.bf16.msra.mxu0 %v2172
    %2340 = vmatprep.mubr.bf16.mxu0 %v1497
    %2341 = vmatmul.mubr.bf16.gmra.mrb[0].mxu0 %v1496
    %v2342 = vpop.f32.mrb[0].mxu0
    %v2343 = vadd.f32 %v1631, %v2342
    %v2344 = vpop.f32.mrb[0].mxu0
    %v2345 = vadd.f32 %v1635, %v2344
    %v2346 = vpop.f32.mrb[0].mxu0
    %v2347 = vpop.f32.mrb[0].mxu0
    %2348 = vdwg.mxu0
    %2349 = vmatprep.subr.bf16.mxu0 %v2055
    %2350 = vmatpush1.bf16.msra.mxu0 %v2054
    %2351 = vmatprep.subr.bf16.mxu0 %v2063
    %2352 = vmatpush1.bf16.msra.mxu0 %v2062
    %2353 = vmatprep.subr.bf16.mxu0 %v2071
    %2354 = vmatpush1.bf16.msra.mxu0 %v2070
    %2355 = vmatprep.subr.bf16.mxu0 %v2079
    %2356 = vmatpush1.bf16.msra.mxu0 %v2078
    %2357 = vmatprep.subr.bf16.mxu0 %v2087
    %2358 = vmatpush1.bf16.msra.mxu0 %v2086
    %2359 = vmatprep.subr.bf16.mxu0 %v2095
    %2360 = vmatpush1.bf16.msra.mxu0 %v2094
    %2361 = vmatprep.subr.bf16.mxu0 %v2103
    %2362 = vmatpush1.bf16.msra.mxu0 %v2102
    %2363 = vmatprep.subr.bf16.mxu0 %v2111
    %2364 = vmatpush1.bf16.msra.mxu0 %v2110
    %2365 = vmatprep.subr.bf16.mxu0 %v2119
    %2366 = vmatpush1.bf16.msra.mxu0 %v2118
    %2367 = vmatprep.subr.bf16.mxu0 %v2127
    %2368 = vmatpush1.bf16.msra.mxu0 %v2126
    %2369 = vmatprep.subr.bf16.mxu0 %v2135
    %2370 = vmatpush1.bf16.msra.mxu0 %v2134
    %2371 = vmatprep.subr.bf16.mxu0 %v2143
    %2372 = vmatpush1.bf16.msra.mxu0 %v2142
    %2373 = vmatprep.subr.bf16.mxu0 %v2151
    %2374 = vmatpush1.bf16.msra.mxu0 %v2150
    %2375 = vmatprep.subr.bf16.mxu0 %v2159
    %2376 = vmatpush1.bf16.msra.mxu0 %v2158
    %2377 = vmatprep.subr.bf16.mxu0 %v2167
    %2378 = vmatpush1.bf16.msra.mxu0 %v2166
    %2379 = vmatprep.subr.bf16.mxu0 %v2175
    %2380 = vmatpush1.bf16.msra.mxu0 %v2174
    %2381 = vmatprep.mubr.bf16.mxu0 %v1497
    %2382 = vmatmul.mubr.bf16.gmra.mrb[0].mxu0 %v1496
    %v2383 = vpop.f32.mrb[0].mxu0
    %v2384 = vadd.f32 %v1639, %v2383
    %v2385 = vpop.f32.mrb[0].mxu0
    %v2386 = vadd.f32 %v1643, %v2385
    %v2387 = vpop.f32.mrb[0].mxu0
    %v2388 = vpop.f32.mrb[0].mxu0
    %2389 = vdwg.mxu0
    %2390 = vmatprep.subr.bf16.mxu0 %v2057
    %2391 = vmatpush1.bf16.msra.mxu0 %v2056
    %2392 = vmatprep.subr.bf16.mxu0 %v2065
    %2393 = vmatpush1.bf16.msra.mxu0 %v2064
    %2394 = vmatprep.subr.bf16.mxu0 %v2073
    %2395 = vmatpush1.bf16.msra.mxu0 %v2072
    %2396 = vmatprep.subr.bf16.mxu0 %v2081
    %2397 = vmatpush1.bf16.msra.mxu0 %v2080
    %2398 = vmatprep.subr.bf16.mxu0 %v2089
    %2399 = vmatpush1.bf16.msra.mxu0 %v2088
    %2400 = vmatprep.subr.bf16.mxu0 %v2097
    %2401 = vmatpush1.bf16.msra.mxu0 %v2096
    %2402 = vmatprep.subr.bf16.mxu0 %v2105
    %2403 = vmatpush1.bf16.msra.mxu0 %v2104
    %2404 = vmatprep.subr.bf16.mxu0 %v2113
    %2405 = vmatpush1.bf16.msra.mxu0 %v2112
    %2406 = vmatprep.subr.bf16.mxu0 %v2121
    %2407 = vmatpush1.bf16.msra.mxu0 %v2120
    %2408 = vmatprep.subr.bf16.mxu0 %v2129
    %2409 = vmatpush1.bf16.msra.mxu0 %v2128
    %2410 = vmatprep.subr.bf16.mxu0 %v2137
    %2411 = vmatpush1.bf16.msra.mxu0 %v2136
    %2412 = vmatprep.subr.bf16.mxu0 %v2145
    %2413 = vmatpush1.bf16.msra.mxu0 %v2144
    %2414 = vmatprep.subr.bf16.mxu0 %v2153
    %2415 = vmatpush1.bf16.msra.mxu0 %v2152
    %2416 = vmatprep.subr.bf16.mxu0 %v2161
    %2417 = vmatpush1.bf16.msra.mxu0 %v2160
    %2418 = vmatprep.subr.bf16.mxu0 %v2169
    %2419 = vmatpush1.bf16.msra.mxu0 %v2168
    %2420 = vmatprep.subr.bf16.mxu0 %v2177
    %2421 = vmatpush1.bf16.msra.mxu0 %v2176
    %2422 = vmatprep.mubr.bf16.mxu0 %v1497
    %2423 = vmatmul.mubr.bf16.gmra.mrb[0].mxu0 %v1496
    %v2424 = vpop.f32.mrb[0].mxu0
    %v2425 = vadd.f32 %v1647, %v2424
    %v2426 = vpop.f32.mrb[0].mxu0
    %v2427 = vadd.f32 %v1651, %v2426
    %v2428 = vpop.f32.mrb[0].mxu0
    %v2429 = vpop.f32.mrb[0].mxu0
    %2430 = vdwg.mxu0
    %2431 = vmatprep.subr.bf16.mxu0 %v2059
    %2432 = vmatpush1.bf16.msra.mxu0 %v2058
    %2433 = vmatprep.subr.bf16.mxu0 %v2067
    %2434 = vmatpush1.bf16.msra.mxu0 %v2066
    %2435 = vmatprep.subr.bf16.mxu0 %v2075
    %2436 = vmatpush1.bf16.msra.mxu0 %v2074
    %2437 = vmatprep.subr.bf16.mxu0 %v2083
    %2438 = vmatpush1.bf16.msra.mxu0 %v2082
    %2439 = vmatprep.subr.bf16.mxu0 %v2091
    %2440 = vmatpush1.bf16.msra.mxu0 %v2090
    %2441 = vmatprep.subr.bf16.mxu0 %v2099
    %2442 = vmatpush1.bf16.msra.mxu0 %v2098
    %2443 = vmatprep.subr.bf16.mxu0 %v2107
    %2444 = vmatpush1.bf16.msra.mxu0 %v2106
    %2445 = vmatprep.subr.bf16.mxu0 %v2115
    %2446 = vmatpush1.bf16.msra.mxu0 %v2114
    %2447 = vmatprep.subr.bf16.mxu0 %v2123
    %2448 = vmatpush1.bf16.msra.mxu0 %v2122
    %2449 = vmatprep.subr.bf16.mxu0 %v2131
    %2450 = vmatpush1.bf16.msra.mxu0 %v2130
    %2451 = vmatprep.subr.bf16.mxu0 %v2139
    %2452 = vmatpush1.bf16.msra.mxu0 %v2138
    %2453 = vmatprep.subr.bf16.mxu0 %v2147
    %2454 = vmatpush1.bf16.msra.mxu0 %v2146
    %2455 = vmatprep.subr.bf16.mxu0 %v2155
    %2456 = vmatpush1.bf16.msra.mxu0 %v2154
    %2457 = vmatprep.subr.bf16.mxu0 %v2163
    %2458 = vmatpush1.bf16.msra.mxu0 %v2162
    %2459 = vmatprep.subr.bf16.mxu0 %v2171
    %2460 = vmatpush1.bf16.msra.mxu0 %v2170
    %2461 = vmatprep.subr.bf16.mxu0 %v2179
    %2462 = vmatpush1.bf16.msra.mxu0 %v2178
    %2463 = vmatprep.mubr.bf16.mxu0 %v1497
    %2464 = vmatmul.mubr.bf16.gmra.mrb[0].mxu0 %v1496
    %v2465 = vpop.f32.mrb[0].mxu0
    %v2466 = vadd.f32 %v1655, %v2465
    %v2467 = vpop.f32.mrb[0].mxu0
    %v2468 = vadd.f32 %v1659, %v2467
    %v2469 = vpop.f32.mrb[0].mxu0
    %v2470 = vpop.f32.mrb[0].mxu0
    %2471 = vdwg.mxu0
    %v2472 = vxor.u32 %v2343, 2147483648
    %v2473 = vxor.u32 %v2345, 2147483648
    %v2474 = vxor.u32 %v2384, 2147483648
    %v2475 = vxor.u32 %v2386, 2147483648
    %v2476 = vxor.u32 %v2425, 2147483648
    %v2477 = vxor.u32 %v2427, 2147483648
    %v2478 = vxor.u32 %v2466, 2147483648
    %v2479 = vxor.u32 %v2468, 2147483648
    %v2480 = vmul.f32 %v2472, 1.442695
    %v2481 = vpow.pop %v2480
    %v2482 = vmul.f32 %v2473, 1.442695
    %v2483 = vpow.pop %v2482
    %v2484 = vmul.f32 %v2474, 1.442695
    %v2485 = vpow.pop %v2484
    %v2486 = vmul.f32 %v2475, 1.442695
    %v2487 = vpow.pop %v2486
    %v2488 = vmul.f32 %v2476, 1.442695
    %v2489 = vpow.pop %v2488
    %v2490 = vmul.f32 %v2477, 1.442695
    %v2491 = vpow.pop %v2490
    %v2492 = vmul.f32 %v2478, 1.442695
    %v2493 = vpow.pop %v2492
    %v2494 = vmul.f32 %v2479, 1.442695
    %v2495 = vpow.pop %v2494
    %v2496 = vadd.f32 %v2481, 1.0
    %v2497 = vadd.f32 %v2483, 1.0
    %v2498 = vadd.f32 %v2485, 1.0
    %v2499 = vadd.f32 %v2487, 1.0
    %v2500 = vadd.f32 %v2489, 1.0
    %v2501 = vadd.f32 %v2491, 1.0
    %v2502 = vadd.f32 %v2493, 1.0
    %v2503 = vadd.f32 %v2495, 1.0
    %v2504 = vrcp.pop %v2496
    %v2505 = vmul.f32 1.0, %v2504
    %v2506 = vrcp.pop %v2497
    %v2507 = vmul.f32 1.0, %v2506
    %v2508 = vrcp.pop %v2498
    %v2509 = vmul.f32 1.0, %v2508
    %v2510 = vrcp.pop %v2499
    %v2511 = vmul.f32 1.0, %v2510
    %v2512 = vrcp.pop %v2500
    %v2513 = vmul.f32 1.0, %v2512
    %v2514 = vrcp.pop %v2501
    %v2515 = vmul.f32 1.0, %v2514
    %v2516 = vrcp.pop %v2502
    %v2517 = vmul.f32 1.0, %v2516
    %v2518 = vrcp.pop %v2503
    %v2519 = vmul.f32 1.0, %v2518
    %v2528 = vcombine.low %v2505, %v2507
    %v2529 = vcombine.low %v2509, %v2511
    %v2531 = vunpack.c.l.s4 1983009808
    %v2532 = vunpack.c.0.s8 %v2531
    %v2533 = vlaneseq
    %v2534 = vshrl.u32 %v2533, 7
    %v2535 = vsub.s32 %v2532, %v2534
    %v2536 = vrot.slane %v2528, %v2535
    %v2538 = vunpack.c.l.s4 1983009808
    %v2539 = vunpack.c.0.s8 %v2538
    %v2540 = vlaneseq
    %v2541 = vshrl.u32 %v2540, 7
    %v2542 = vsub.s32 %v2539, %v2541
    %v2543 = vrot.slane %v2529, %v2542
    %v2544 = vcombine.low %v2536, %v2543
    %v2545 = vcombine.low %v2513, %v2515
    %v2546 = vcombine.low %v2517, %v2519
    %v2548 = vunpack.c.l.s4 1983009808
    %v2549 = vunpack.c.0.s8 %v2548
    %v2550 = vlaneseq
    %v2551 = vshrl.u32 %v2550, 7
    %v2552 = vsub.s32 %v2549, %v2551
    %v2553 = vrot.slane %v2545, %v2552
    %v2555 = vunpack.c.l.s4 1983009808
    %v2556 = vunpack.c.0.s8 %v2555
    %v2557 = vlaneseq
    %v2558 = vshrl.u32 %v2557, 7
    %v2559 = vsub.s32 %v2556, %v2558
    %v2560 = vrot.slane %v2546, %v2559
    %v2561 = vcombine.low %v2553, %v2560
    %2564 = vst [vmem:[%s10] sm:$0xff] %v2544
    %2565 = vst [vmem:[%s10 + $0x8] sm:$0xff] %v2561
    // Predicated region
    $region54: #{vae_forward.1} parent=1 // pred_check
      _
    $region55: #{vae_forward.1} parent=1 // pred_check_branch
      %2567 = sbr.rel (0) target = $region57
    $region56: #{vae_forward.1} parent=1 // pred_region
      _
    $region57: #{vae_forward.1} parent=1 // pred_fallthru
      _
    // Predicated region
    $region58: #{vae_forward.1} parent=1 // pred_check
      _
    $region59: #{vae_forward.1} parent=1 // pred_check_branch
      %2569 = sbr.rel (0) target = $region61
    $region60: #{vae_forward.1} parent=1 // pred_region
      _
    $region61: #{vae_forward.1} parent=1 // pred_fallthru
      _
    // Predicated region
    $region62: #{vae_forward.1} parent=1 // pred_check
      _
    $region63: #{vae_forward.1} parent=1 // pred_check_branch
      %2571 = sbr.rel (0) target = $region65
    $region64: #{vae_forward.1} parent=1 // pred_region
      _
    $region65: #{vae_forward.1} parent=1 // pred_fallthru
      _
    // Predicated region
    $region66: #{vae_forward.1} parent=1 // pred_check
      _
    $region67: #{vae_forward.1} parent=1 // pred_check_branch
      %2573 = sbr.rel (0) target = $region69
    $region68: #{vae_forward.1} parent=1 // pred_region
      _
    $region69: #{vae_forward.1} parent=1 // pred_fallthru
      _
    %2574 = vsyncpa [#allocation3], 1
    %2575 = vsyncpa [#allocation5], 1

</llo_original>
